<compile_context>
chip_gen: v7x
topology: tpu7x:2x2x1
jax: 0.10.0
libtpu: 0.0.40
codegen_flags: <defaults>
</compile_context>

<pallas_src>
import functools
import math

import jax
import jax.numpy as jnp
from jax import lax
from jax.experimental import pallas as pl
from jax.experimental.pallas import tpu as pltpu


def _round_up(n, m):
    return ((n + m - 1) // m) * m


def mha_kernel(x_ref, wqkv_ref, wp_ref, bp_ref, o_ref, cat_ref,
               *, batch_blk, seq, n_head, n_embd):
    """One grid step = `batch_blk` batch elements; all heads fused.

    x_ref    : (Bt, T, C)    input dtype (cast to bf16 in-kernel)
    wqkv_ref : (C, Nq)       bf16  fused [Wq*scale | Wk | Wv], zero-padded N tail
    wp_ref   : (Kp, C)       bf16  fused output projection, zero-padded K tail
    bp_ref   : (1, C)        f32   projection bias
    o_ref    : (Bt, T, C)    bf16
    cat_ref  : (Bt*T, Kp)    bf16  VMEM concat slab (scratch)
    """
    Bt, T, H, C = batch_blk, seq, n_head, n_embd
    HC = H * C
    Kp = cat_ref.shape[-1]

    # Position-wise fused QKV matmul over the whole (Bt*T) row slab (fills MXU M).
    xm = x_ref[...].reshape(Bt * T, C).astype(jnp.bfloat16)
    qkv = jnp.dot(xm, wqkv_ref[...], preferred_element_type=jnp.float32)   # (Bt*T, Nq) f32

    # Zero the padded tail of the concat slab so padded K columns of the
    # projection contribute exactly nothing.
    if Kp > HC:
        cat_ref[:, pl.ds(HC, Kp - HC)] = jnp.zeros((Bt * T, Kp - HC), cat_ref.dtype)

    row = lax.broadcasted_iota(jnp.int32, (T, T), 0)
    col = lax.broadcasted_iota(jnp.int32, (T, T), 1)
    causal = col <= row

    # Per (batch, head) attention. Bt and H are small static constants -> unrolled.
    for b in range(Bt):
        r0 = b * T
        for h in range(H):
            q = qkv[r0:r0 + T, h * C:(h + 1) * C]                  # scale folded into Wq
            k = qkv[r0:r0 + T, HC + h * C:HC + (h + 1) * C]
            v = qkv[r0:r0 + T, 2 * HC + h * C:2 * HC + (h + 1) * C]

            # q @ k^T without an explicit transpose (contract the lane dim).
            s = lax.dot_general(q, k, (((1,), (1,)), ((), ())),
                                preferred_element_type=jnp.float32)
            s = jnp.where(causal, s, -1e30)

            # Softmax along keys in f32; approx reciprocal goes to the EUP slot.
            m = jnp.max(s, axis=-1, keepdims=True)
            p = jnp.exp(s - m)
            p = p * pl.reciprocal(jnp.sum(p, axis=-1, keepdims=True), approx=True)

            hv = jnp.dot(p, v, preferred_element_type=jnp.float32)  # (T, C) f32
            # bf16 write straight into the concat slab at this head's lane offset.
            cat_ref[pl.ds(r0, T), pl.ds(h * C, C)] = hv.astype(cat_ref.dtype)

    # Single big-K output projection from the slab; bias added exactly once.
    y = jnp.dot(cat_ref[...], wp_ref[...], preferred_element_type=jnp.float32)
    y = y + bp_ref[...]
    o_ref[...] = y.reshape(Bt, T, C).astype(o_ref.dtype)


def _pick_batch_block(B, T, target_rows=256):
    """Largest divisor Bt of B with Bt*T <= max(target_rows, T) (fills MXU M)."""
    bt = 1
    for d in range(1, B + 1):
        if B % d == 0 and d * T <= max(target_rows, T):
            bt = d
    return bt


def _padded_block_bytes(shape, dtype):
    """Block size rounded to (8, 128) tile granularity (conservative VMEM estimate)."""
    shape = list(shape)
    if len(shape) >= 2:
        shape[-2] = _round_up(shape[-2], 8)
        shape[-1] = _round_up(shape[-1], 128)
    elif shape:
        shape[-1] = _round_up(shape[-1], 128)
    n = 1
    for s in shape:
        n *= s
    return n * jnp.dtype(dtype).itemsize


def multi_head_attention(x, wq, wk, wv, wp, bp, *, lane=128):
    """x: (B, T, C); wq/wk/wv/wp: (H, C, C) in x@W orientation; bp: (1, C) -> (B, T, C)."""
    B, T, C = x.shape
    H = wq.shape[0]
    HC = H * C
    scale = 1.0 / math.sqrt(C)

    Nq = _round_up(3 * HC, lane)          # fused QKV output width
    Kp = _round_up(HC, lane)              # projection contracting width

    # ---- weight packing (wrapper-side; runs once / is CSE'd under jit) ------------
    def heads_to_cols(w):                 # (H, C, C) -> (C, H*C), head h in cols [h*C:(h+1)*C]
        return jnp.transpose(w, (1, 0, 2)).reshape(C, HC)

    wqkv = jnp.concatenate(
        [heads_to_cols(wq * scale), heads_to_cols(wk), heads_to_cols(wv)], axis=-1)
    if Nq > 3 * HC:                       # pad only the fused N dim
        wqkv = jnp.concatenate([wqkv, jnp.zeros((C, Nq - 3 * HC), wqkv.dtype)], axis=-1)
    wqkv = wqkv.astype(jnp.bfloat16)                                    # (C, Nq)

    wp_full = wp.reshape(HC, C)
    if Kp > HC:                           # pad only the fused K dim
        wp_full = jnp.concatenate(
            [wp_full, jnp.zeros((Kp - HC, C), wp_full.dtype)], axis=0)
    wp_full = wp_full.astype(jnp.bfloat16)                              # (Kp, C)

    bp_f32 = bp.astype(jnp.float32).reshape(1, C)

    Bt = _pick_batch_block(B, T)
    grid = (B // Bt,)

    kernel = functools.partial(mha_kernel, batch_blk=Bt, seq=T, n_head=H, n_embd=C)

    # Explicit VMEM budget from actual block sizes (double-buffered blocks + scratch),
    # with generous headroom so we never set the scoped limit below what Mosaic needs.
    resident = 2 * (_padded_block_bytes((Bt, T, C), x.dtype)
                    + _padded_block_bytes((C, Nq), jnp.bfloat16)
                    + _padded_block_bytes((Kp, C), jnp.bfloat16)
                    + _padded_block_bytes((1, C), jnp.float32)
                    + _padded_block_bytes((Bt, T, C), jnp.bfloat16))
    resident += _padded_block_bytes((Bt * T, Kp), jnp.bfloat16)
    vmem_limit = int(max(4 * resident, 8 * 1024 * 1024))

    out = pl.pallas_call(
        kernel,
        out_shape=jax.ShapeDtypeStruct((B, T, C), jnp.bfloat16),
        grid_spec=pltpu.PrefetchScalarGridSpec(
            num_scalar_prefetch=0,
            grid=grid,
            in_specs=[
                pl.BlockSpec((Bt, T, C), lambda b: (b, 0, 0)),     # x (per batch block)
                pl.BlockSpec((C, Nq), lambda b: (0, 0)),           # Wqkv (VMEM-resident)
                pl.BlockSpec((Kp, C), lambda b: (0, 0)),           # Wp   (VMEM-resident)
                pl.BlockSpec((1, C), lambda b: (0, 0)),            # bias (VMEM-resident)
            ],
            out_specs=pl.BlockSpec((Bt, T, C), lambda b: (b, 0, 0)),
            scratch_shapes=[pltpu.VMEM((Bt * T, Kp), jnp.bfloat16)],
        ),
        compiler_params=pltpu.CompilerParams(
            dimension_semantics=("parallel",),                      # shard batch blocks over TCs
            vmem_limit_bytes=vmem_limit),
    )(x, wqkv, wp_full, bp_f32)

    # Unpadded bf16 writeback from the kernel; cast back only if the caller wants f32.
    return out if x.dtype == jnp.bfloat16 else out.astype(x.dtype)


def reference_forward(x, wq, wk, wv, wp, bp):
    """Pure-JAX f32 reference mirroring the PyTorch module semantics."""
    B, T, C = x.shape
    H = wq.shape[0]
    mask = jnp.tril(jnp.ones((T, T), dtype=bool))
    heads = []
    for h in range(H):
        q = x @ wq[h]
        k = x @ wk[h]
        v = x @ wv[h]
        s = (q @ jnp.swapaxes(k, -1, -2)) / math.sqrt(C)
        s = jnp.where(mask, s, -jnp.inf)
        p = jax.nn.softmax(s, axis=-1)
        heads.append(p @ v)
    cat = jnp.concatenate(heads, axis=-1)                 # (B, T, H*C)
    wp_full = wp.reshape(H * C, C)                        # (H*C, C)
    return cat @ wp_full + bp[0]


if __name__ == "__main__":
    # config: n_embd = 16, n_head = 4, block_size (seq) = 8, batch = 2
    B, T, C, H = 2, 8, 16, 4

    key = jax.random.PRNGKey(0)
    kx, kq, kk, kv, kp, kb = jax.random.split(key, 6)

    x = jax.random.normal(kx, (B, T, C), dtype=jnp.float32)
    # Per-head q/k/v weights (Linear(n_embd, n_embd, bias=False)) in "x @ W" orientation.
    wq = jax.random.normal(kq, (H, C, C), dtype=jnp.float32) * 0.02
    wk = jax.random.normal(kk, (H, C, C), dtype=jnp.float32) * 0.02
    wv = jax.random.normal(kv, (H, C, C), dtype=jnp.float32) * 0.02
    # Projection Linear(n_embd * n_head, n_embd): weight split per head as (H, C, C); bias (1, C).
    wp = jax.random.normal(kp, (H, C, C), dtype=jnp.float32) * 0.02
    bp = jax.random.normal(kb, (1, C), dtype=jnp.float32) * 0.02

    out = multi_head_attention(x, wq, wk, wv, wp, bp)
    out = jax.block_until_ready(out)

    ref = reference_forward(x, wq, wk, wv, wp, bp)
    assert out.shape == (B, T, C)
    # bf16 weights/activations/output with f32 accumulation -> loosened tolerance.
    assert jnp.allclose(out, ref, atol=2e-3, rtol=2e-2), (
        f"max abs err {jnp.max(jnp.abs(out - ref))}")

    print("KERNEL_OK")
</pallas_src>

<mosaic_0001>
module attributes {stable_mosaic.version = 11 : i64} {
  func.func @mha_kernel(%arg0: i32, %arg1: memref<2x8x16xf32, #tpu.memory_space<vmem>>, %arg2: memref<16x256xbf16, #tpu.memory_space<vmem>>, %arg3: memref<128x16xbf16, #tpu.memory_space<vmem>>, %arg4: memref<1x16xf32, #tpu.memory_space<vmem>>, %arg5: memref<2x8x16xbf16, #tpu.memory_space<vmem>>, %arg6: memref<16x128xbf16, #tpu.memory_space<vmem>>) attributes {dimension_semantics = [#tpu.dimension_semantics<parallel>], iteration_bounds = array<i64: 1>, scalar_prefetch = 0 : i64, scratch_operands = 1 : i64, tpu.core_type = #tpu.core_type<tc>, window_params = [{transform_indices = @transform_0, window_bounds = array<i64: 2, 8, 16>}, {pipeline_mode = #tpu.pipeline_mode<synchronous>, transform_indices = @transform_1, window_bounds = array<i64: 16, 256>}, {pipeline_mode = #tpu.pipeline_mode<synchronous>, transform_indices = @transform_2, window_bounds = array<i64: 128, 16>}, {pipeline_mode = #tpu.pipeline_mode<synchronous>, transform_indices = @transform_3, window_bounds = array<i64: 1, 16>}, {transform_indices = @transform_4, window_bounds = array<i64: 2, 8, 16>}]} {
    %c0 = arith.constant 0 : index
    %c0_0 = arith.constant 0 : index
    %c0_1 = arith.constant 0 : index
    %0 = vector.load %arg1[%c0, %c0_0, %c0_1] : memref<2x8x16xf32, #tpu.memory_space<vmem>>, vector<2x8x16xf32>
    %1 = vector.shape_cast %0 : vector<2x8x16xf32> to vector<16x16xf32>
    %2 = arith.truncf %1 : vector<16x16xf32> to vector<16x16xbf16>
    %c0_2 = arith.constant 0 : index
    %c0_3 = arith.constant 0 : index
    %3 = vector.load %arg2[%c0_2, %c0_3] : memref<16x256xbf16, #tpu.memory_space<vmem>>, vector<16x256xbf16>
    %cst = arith.constant dense<0.000000e+00> : vector<16x256xf32>
    %4 = tpu.matmul %2, %3, %cst {dimension_numbers = #tpu.dot_dimension_numbers<[1], [0], [0], [1], [0, 0, 1, 1], [], []>} : vector<16x16xbf16>, vector<16x256xbf16>, vector<16x256xf32> -> vector<16x256xf32>
    %cst_4 = arith.constant 0.000000e+00 : bf16
    %5 = vector.broadcast %cst_4 : bf16 to vector<16x64xbf16>
    %c0_5 = arith.constant 0 : index
    %c64 = arith.constant 64 : index
    %6 = vector.load %arg6[%c0_5, %c64] : memref<16x128xbf16, #tpu.memory_space<vmem>>, vector<16x64xbf16>
    tpu.vector_store %arg6[%c0_5, %c64], %5 {strides = array<i32>} : memref<16x128xbf16, #tpu.memory_space<vmem>>, vector<16x64xbf16>,
    %7 = tpu.iota {dimensions = array<i32: 0>} : vector<8x8xi32>
    %8 = tpu.iota {dimensions = array<i32: 1>} : vector<8x8xi32>
    %9 = arith.cmpi sle, %8, %7 : vector<8x8xi32>
    %10 = vector.extract_strided_slice %4 {offsets = [0, 0], sizes = [8, 16], strides = [1, 1]} : vector<16x256xf32> to vector<8x16xf32>
    %11 = vector.extract_strided_slice %4 {offsets = [0, 64], sizes = [8, 16], strides = [1, 1]} : vector<16x256xf32> to vector<8x16xf32>
    %12 = vector.extract_strided_slice %4 {offsets = [0, 128], sizes = [8, 16], strides = [1, 1]} : vector<16x256xf32> to vector<8x16xf32>
    %cst_6 = arith.constant dense<0.000000e+00> : vector<8x8xf32>
    %13 = tpu.matmul %10, %11, %cst_6 {dimension_numbers = #tpu.dot_dimension_numbers<[1], [1], [0], [0], [0, 0, 1, 0], [], []>} : vector<8x16xf32>, vector<8x16xf32>, vector<8x8xf32> -> vector<8x8xf32>
    %cst_7 = arith.constant -1.000000e+30 : f32
    %14 = vector.broadcast %cst_7 : f32 to vector<8x8xf32>
    %15 = arith.select %9, %13, %14 : vector<8x8xi1>, vector<8x8xf32>
    %cst_8 = arith.constant dense<0xFF800000> : vector<8xf32>
    %16 = vector.multi_reduction <maximumf>, %15, %cst_8 [1] : vector<8x8xf32> to vector<8xf32>
    %17 = vector.shape_cast %16 : vector<8xf32> to vector<8x1xf32>
    %18 = vector.broadcast %17 : vector<8x1xf32> to vector<8x8xf32>
    %19 = arith.subf %15, %18 : vector<8x8xf32>
    %20 = math.exp %19 : vector<8x8xf32>
    %cst_9 = arith.constant dense<0.000000e+00> : vector<8xf32>
    %21 = vector.multi_reduction <add>, %20, %cst_9 [1] : vector<8x8xf32> to vector<8xf32>
    %22 = vector.shape_cast %21 : vector<8xf32> to vector<8x1xf32>
    %23 = tpu.reciprocal %22 {approx = true} : vector<8x1xf32> -> vector<8x1xf32>
    %24 = vector.broadcast %23 : vector<8x1xf32> to vector<8x8xf32>
    %25 = arith.mulf %20, %24 : vector<8x8xf32>
    %cst_10 = arith.constant dense<0.000000e+00> : vector<8x16xf32>
    %26 = tpu.matmul %25, %12, %cst_10 {dimension_numbers = #tpu.dot_dimension_numbers<[1], [0], [0], [1], [0, 0, 1, 1], [], []>} : vector<8x8xf32>, vector<8x16xf32>, vector<8x16xf32> -> vector<8x16xf32>
    %27 = arith.truncf %26 : vector<8x16xf32> to vector<8x16xbf16>
    %c0_11 = arith.constant 0 : index
    %c0_12 = arith.constant 0 : index
    %28 = vector.load %arg6[%c0_11, %c0_12] : memref<16x128xbf16, #tpu.memory_space<vmem>>, vector<8x16xbf16>
    tpu.vector_store %arg6[%c0_11, %c0_12], %27 {strides = array<i32>} : memref<16x128xbf16, #tpu.memory_space<vmem>>, vector<8x16xbf16>,
    %29 = vector.extract_strided_slice %4 {offsets = [0, 16], sizes = [8, 16], strides = [1, 1]} : vector<16x256xf32> to vector<8x16xf32>
    %30 = vector.extract_strided_slice %4 {offsets = [0, 80], sizes = [8, 16], strides = [1, 1]} : vector<16x256xf32> to vector<8x16xf32>
    %31 = vector.extract_strided_slice %4 {offsets = [0, 144], sizes = [8, 16], strides = [1, 1]} : vector<16x256xf32> to vector<8x16xf32>
    %cst_13 = arith.constant dense<0.000000e+00> : vector<8x8xf32>
    %32 = tpu.matmul %29, %30, %cst_13 {dimension_numbers = #tpu.dot_dimension_numbers<[1], [1], [0], [0], [0, 0, 1, 0], [], []>} : vector<8x16xf32>, vector<8x16xf32>, vector<8x8xf32> -> vector<8x8xf32>
    %cst_14 = arith.constant -1.000000e+30 : f32
    %33 = vector.broadcast %cst_14 : f32 to vector<8x8xf32>
    %34 = arith.select %9, %32, %33 : vector<8x8xi1>, vector<8x8xf32>
    %cst_15 = arith.constant dense<0xFF800000> : vector<8xf32>
    %35 = vector.multi_reduction <maximumf>, %34, %cst_15 [1] : vector<8x8xf32> to vector<8xf32>
    %36 = vector.shape_cast %35 : vector<8xf32> to vector<8x1xf32>
    %37 = vector.broadcast %36 : vector<8x1xf32> to vector<8x8xf32>
    %38 = arith.subf %34, %37 : vector<8x8xf32>
    %39 = math.exp %38 : vector<8x8xf32>
    %cst_16 = arith.constant dense<0.000000e+00> : vector<8xf32>
    %40 = vector.multi_reduction <add>, %39, %cst_16 [1] : vector<8x8xf32> to vector<8xf32>
    %41 = vector.shape_cast %40 : vector<8xf32> to vector<8x1xf32>
    %42 = tpu.reciprocal %41 {approx = true} : vector<8x1xf32> -> vector<8x1xf32>
    %43 = vector.broadcast %42 : vector<8x1xf32> to vector<8x8xf32>
    %44 = arith.mulf %39, %43 : vector<8x8xf32>
    %cst_17 = arith.constant dense<0.000000e+00> : vector<8x16xf32>
    %45 = tpu.matmul %44, %31, %cst_17 {dimension_numbers = #tpu.dot_dimension_numbers<[1], [0], [0], [1], [0, 0, 1, 1], [], []>} : vector<8x8xf32>, vector<8x16xf32>, vector<8x16xf32> -> vector<8x16xf32>
    %46 = arith.truncf %45 : vector<8x16xf32> to vector<8x16xbf16>
    %c0_18 = arith.constant 0 : index
    %c16 = arith.constant 16 : index
    %47 = vector.load %arg6[%c0_18, %c16] : memref<16x128xbf16, #tpu.memory_space<vmem>>, vector<8x16xbf16>
    tpu.vector_store %arg6[%c0_18, %c16], %46 {strides = array<i32>} : memref<16x128xbf16, #tpu.memory_space<vmem>>, vector<8x16xbf16>,
    %48 = vector.extract_strided_slice %4 {offsets = [0, 32], sizes = [8, 16], strides = [1, 1]} : vector<16x256xf32> to vector<8x16xf32>
    %49 = vector.extract_strided_slice %4 {offsets = [0, 96], sizes = [8, 16], strides = [1, 1]} : vector<16x256xf32> to vector<8x16xf32>
    %50 = vector.extract_strided_slice %4 {offsets = [0, 160], sizes = [8, 16], strides = [1, 1]} : vector<16x256xf32> to vector<8x16xf32>
    %cst_19 = arith.constant dense<0.000000e+00> : vector<8x8xf32>
    %51 = tpu.matmul %48, %49, %cst_19 {dimension_numbers = #tpu.dot_dimension_numbers<[1], [1], [0], [0], [0, 0, 1, 0], [], []>} : vector<8x16xf32>, vector<8x16xf32>, vector<8x8xf32> -> vector<8x8xf32>
    %cst_20 = arith.constant -1.000000e+30 : f32
    %52 = vector.broadcast %cst_20 : f32 to vector<8x8xf32>
    %53 = arith.select %9, %51, %52 : vector<8x8xi1>, vector<8x8xf32>
    %cst_21 = arith.constant dense<0xFF800000> : vector<8xf32>
    %54 = vector.multi_reduction <maximumf>, %53, %cst_21 [1] : vector<8x8xf32> to vector<8xf32>
    %55 = vector.shape_cast %54 : vector<8xf32> to vector<8x1xf32>
    %56 = vector.broadcast %55 : vector<8x1xf32> to vector<8x8xf32>
    %57 = arith.subf %53, %56 : vector<8x8xf32>
    %58 = math.exp %57 : vector<8x8xf32>
    %cst_22 = arith.constant dense<0.000000e+00> : vector<8xf32>
    %59 = vector.multi_reduction <add>, %58, %cst_22 [1] : vector<8x8xf32> to vector<8xf32>
    %60 = vector.shape_cast %59 : vector<8xf32> to vector<8x1xf32>
    %61 = tpu.reciprocal %60 {approx = true} : vector<8x1xf32> -> vector<8x1xf32>
    %62 = vector.broadcast %61 : vector<8x1xf32> to vector<8x8xf32>
    %63 = arith.mulf %58, %62 : vector<8x8xf32>
    %cst_23 = arith.constant dense<0.000000e+00> : vector<8x16xf32>
    %64 = tpu.matmul %63, %50, %cst_23 {dimension_numbers = #tpu.dot_dimension_numbers<[1], [0], [0], [1], [0, 0, 1, 1], [], []>} : vector<8x8xf32>, vector<8x16xf32>, vector<8x16xf32> -> vector<8x16xf32>
    %65 = arith.truncf %64 : vector<8x16xf32> to vector<8x16xbf16>
    %c0_24 = arith.constant 0 : index
    %c32 = arith.constant 32 : index
    %66 = vector.load %arg6[%c0_24, %c32] : memref<16x128xbf16, #tpu.memory_space<vmem>>, vector<8x16xbf16>
    tpu.vector_store %arg6[%c0_24, %c32], %65 {strides = array<i32>} : memref<16x128xbf16, #tpu.memory_space<vmem>>, vector<8x16xbf16>,
    %67 = vector.extract_strided_slice %4 {offsets = [0, 48], sizes = [8, 16], strides = [1, 1]} : vector<16x256xf32> to vector<8x16xf32>
    %68 = vector.extract_strided_slice %4 {offsets = [0, 112], sizes = [8, 16], strides = [1, 1]} : vector<16x256xf32> to vector<8x16xf32>
    %69 = vector.extract_strided_slice %4 {offsets = [0, 176], sizes = [8, 16], strides = [1, 1]} : vector<16x256xf32> to vector<8x16xf32>
    %cst_25 = arith.constant dense<0.000000e+00> : vector<8x8xf32>
    %70 = tpu.matmul %67, %68, %cst_25 {dimension_numbers = #tpu.dot_dimension_numbers<[1], [1], [0], [0], [0, 0, 1, 0], [], []>} : vector<8x16xf32>, vector<8x16xf32>, vector<8x8xf32> -> vector<8x8xf32>
    %cst_26 = arith.constant -1.000000e+30 : f32
    %71 = vector.broadcast %cst_26 : f32 to vector<8x8xf32>
    %72 = arith.select %9, %70, %71 : vector<8x8xi1>, vector<8x8xf32>
    %cst_27 = arith.constant dense<0xFF800000> : vector<8xf32>
    %73 = vector.multi_reduction <maximumf>, %72, %cst_27 [1] : vector<8x8xf32> to vector<8xf32>
    %74 = vector.shape_cast %73 : vector<8xf32> to vector<8x1xf32>
    %75 = vector.broadcast %74 : vector<8x1xf32> to vector<8x8xf32>
    %76 = arith.subf %72, %75 : vector<8x8xf32>
    %77 = math.exp %76 : vector<8x8xf32>
    %cst_28 = arith.constant dense<0.000000e+00> : vector<8xf32>
    %78 = vector.multi_reduction <add>, %77, %cst_28 [1] : vector<8x8xf32> to vector<8xf32>
    %79 = vector.shape_cast %78 : vector<8xf32> to vector<8x1xf32>
    %80 = tpu.reciprocal %79 {approx = true} : vector<8x1xf32> -> vector<8x1xf32>
    %81 = vector.broadcast %80 : vector<8x1xf32> to vector<8x8xf32>
    %82 = arith.mulf %77, %81 : vector<8x8xf32>
    %cst_29 = arith.constant dense<0.000000e+00> : vector<8x16xf32>
    %83 = tpu.matmul %82, %69, %cst_29 {dimension_numbers = #tpu.dot_dimension_numbers<[1], [0], [0], [1], [0, 0, 1, 1], [], []>} : vector<8x8xf32>, vector<8x16xf32>, vector<8x16xf32> -> vector<8x16xf32>
    %84 = arith.truncf %83 : vector<8x16xf32> to vector<8x16xbf16>
    %c0_30 = arith.constant 0 : index
    %c48 = arith.constant 48 : index
    %85 = vector.load %arg6[%c0_30, %c48] : memref<16x128xbf16, #tpu.memory_space<vmem>>, vector<8x16xbf16>
    tpu.vector_store %arg6[%c0_30, %c48], %84 {strides = array<i32>} : memref<16x128xbf16, #tpu.memory_space<vmem>>, vector<8x16xbf16>,
    %86 = vector.extract_strided_slice %4 {offsets = [8, 0], sizes = [8, 16], strides = [1, 1]} : vector<16x256xf32> to vector<8x16xf32>
    %87 = vector.extract_strided_slice %4 {offsets = [8, 64], sizes = [8, 16], strides = [1, 1]} : vector<16x256xf32> to vector<8x16xf32>
    %88 = vector.extract_strided_slice %4 {offsets = [8, 128], sizes = [8, 16], strides = [1, 1]} : vector<16x256xf32> to vector<8x16xf32>
    %cst_31 = arith.constant dense<0.000000e+00> : vector<8x8xf32>
    %89 = tpu.matmul %86, %87, %cst_31 {dimension_numbers = #tpu.dot_dimension_numbers<[1], [1], [0], [0], [0, 0, 1, 0], [], []>} : vector<8x16xf32>, vector<8x16xf32>, vector<8x8xf32> -> vector<8x8xf32>
    %cst_32 = arith.constant -1.000000e+30 : f32
    %90 = vector.broadcast %cst_32 : f32 to vector<8x8xf32>
    %91 = arith.select %9, %89, %90 : vector<8x8xi1>, vector<8x8xf32>
    %cst_33 = arith.constant dense<0xFF800000> : vector<8xf32>
    %92 = vector.multi_reduction <maximumf>, %91, %cst_33 [1] : vector<8x8xf32> to vector<8xf32>
    %93 = vector.shape_cast %92 : vector<8xf32> to vector<8x1xf32>
    %94 = vector.broadcast %93 : vector<8x1xf32> to vector<8x8xf32>
    %95 = arith.subf %91, %94 : vector<8x8xf32>
    %96 = math.exp %95 : vector<8x8xf32>
    %cst_34 = arith.constant dense<0.000000e+00> : vector<8xf32>
    %97 = vector.multi_reduction <add>, %96, %cst_34 [1] : vector<8x8xf32> to vector<8xf32>
    %98 = vector.shape_cast %97 : vector<8xf32> to vector<8x1xf32>
    %99 = tpu.reciprocal %98 {approx = true} : vector<8x1xf32> -> vector<8x1xf32>
    %100 = vector.broadcast %99 : vector<8x1xf32> to vector<8x8xf32>
    %101 = arith.mulf %96, %100 : vector<8x8xf32>
    %cst_35 = arith.constant dense<0.000000e+00> : vector<8x16xf32>
    %102 = tpu.matmul %101, %88, %cst_35 {dimension_numbers = #tpu.dot_dimension_numbers<[1], [0], [0], [1], [0, 0, 1, 1], [], []>} : vector<8x8xf32>, vector<8x16xf32>, vector<8x16xf32> -> vector<8x16xf32>
    %103 = arith.truncf %102 : vector<8x16xf32> to vector<8x16xbf16>
    %c8 = arith.constant 8 : index
    %c0_36 = arith.constant 0 : index
    %104 = vector.load %arg6[%c8, %c0_36] : memref<16x128xbf16, #tpu.memory_space<vmem>>, vector<8x16xbf16>
    tpu.vector_store %arg6[%c8, %c0_36], %103 {strides = array<i32>} : memref<16x128xbf16, #tpu.memory_space<vmem>>, vector<8x16xbf16>,
    %105 = vector.extract_strided_slice %4 {offsets = [8, 16], sizes = [8, 16], strides = [1, 1]} : vector<16x256xf32> to vector<8x16xf32>
    %106 = vector.extract_strided_slice %4 {offsets = [8, 80], sizes = [8, 16], strides = [1, 1]} : vector<16x256xf32> to vector<8x16xf32>
    %107 = vector.extract_strided_slice %4 {offsets = [8, 144], sizes = [8, 16], strides = [1, 1]} : vector<16x256xf32> to vector<8x16xf32>
    %cst_37 = arith.constant dense<0.000000e+00> : vector<8x8xf32>
    %108 = tpu.matmul %105, %106, %cst_37 {dimension_numbers = #tpu.dot_dimension_numbers<[1], [1], [0], [0], [0, 0, 1, 0], [], []>} : vector<8x16xf32>, vector<8x16xf32>, vector<8x8xf32> -> vector<8x8xf32>
    %cst_38 = arith.constant -1.000000e+30 : f32
    %109 = vector.broadcast %cst_38 : f32 to vector<8x8xf32>
    %110 = arith.select %9, %108, %109 : vector<8x8xi1>, vector<8x8xf32>
    %cst_39 = arith.constant dense<0xFF800000> : vector<8xf32>
    %111 = vector.multi_reduction <maximumf>, %110, %cst_39 [1] : vector<8x8xf32> to vector<8xf32>
    %112 = vector.shape_cast %111 : vector<8xf32> to vector<8x1xf32>
    %113 = vector.broadcast %112 : vector<8x1xf32> to vector<8x8xf32>
    %114 = arith.subf %110, %113 : vector<8x8xf32>
    %115 = math.exp %114 : vector<8x8xf32>
    %cst_40 = arith.constant dense<0.000000e+00> : vector<8xf32>
    %116 = vector.multi_reduction <add>, %115, %cst_40 [1] : vector<8x8xf32> to vector<8xf32>
    %117 = vector.shape_cast %116 : vector<8xf32> to vector<8x1xf32>
    %118 = tpu.reciprocal %117 {approx = true} : vector<8x1xf32> -> vector<8x1xf32>
    %119 = vector.broadcast %118 : vector<8x1xf32> to vector<8x8xf32>
    %120 = arith.mulf %115, %119 : vector<8x8xf32>
    %cst_41 = arith.constant dense<0.000000e+00> : vector<8x16xf32>
    %121 = tpu.matmul %120, %107, %cst_41 {dimension_numbers = #tpu.dot_dimension_numbers<[1], [0], [0], [1], [0, 0, 1, 1], [], []>} : vector<8x8xf32>, vector<8x16xf32>, vector<8x16xf32> -> vector<8x16xf32>
    %122 = arith.truncf %121 : vector<8x16xf32> to vector<8x16xbf16>
    %c8_42 = arith.constant 8 : index
    %c16_43 = arith.constant 16 : index
    %123 = vector.load %arg6[%c8_42, %c16_43] : memref<16x128xbf16, #tpu.memory_space<vmem>>, vector<8x16xbf16>
    tpu.vector_store %arg6[%c8_42, %c16_43], %122 {strides = array<i32>} : memref<16x128xbf16, #tpu.memory_space<vmem>>, vector<8x16xbf16>,
    %124 = vector.extract_strided_slice %4 {offsets = [8, 32], sizes = [8, 16], strides = [1, 1]} : vector<16x256xf32> to vector<8x16xf32>
    %125 = vector.extract_strided_slice %4 {offsets = [8, 96], sizes = [8, 16], strides = [1, 1]} : vector<16x256xf32> to vector<8x16xf32>
    %126 = vector.extract_strided_slice %4 {offsets = [8, 160], sizes = [8, 16], strides = [1, 1]} : vector<16x256xf32> to vector<8x16xf32>
    %cst_44 = arith.constant dense<0.000000e+00> : vector<8x8xf32>
    %127 = tpu.matmul %124, %125, %cst_44 {dimension_numbers = #tpu.dot_dimension_numbers<[1], [1], [0], [0], [0, 0, 1, 0], [], []>} : vector<8x16xf32>, vector<8x16xf32>, vector<8x8xf32> -> vector<8x8xf32>
    %cst_45 = arith.constant -1.000000e+30 : f32
    %128 = vector.broadcast %cst_45 : f32 to vector<8x8xf32>
    %129 = arith.select %9, %127, %128 : vector<8x8xi1>, vector<8x8xf32>
    %cst_46 = arith.constant dense<0xFF800000> : vector<8xf32>
    %130 = vector.multi_reduction <maximumf>, %129, %cst_46 [1] : vector<8x8xf32> to vector<8xf32>
    %131 = vector.shape_cast %130 : vector<8xf32> to vector<8x1xf32>
    %132 = vector.broadcast %131 : vector<8x1xf32> to vector<8x8xf32>
    %133 = arith.subf %129, %132 : vector<8x8xf32>
    %134 = math.exp %133 : vector<8x8xf32>
    %cst_47 = arith.constant dense<0.000000e+00> : vector<8xf32>
    %135 = vector.multi_reduction <add>, %134, %cst_47 [1] : vector<8x8xf32> to vector<8xf32>
    %136 = vector.shape_cast %135 : vector<8xf32> to vector<8x1xf32>
    %137 = tpu.reciprocal %136 {approx = true} : vector<8x1xf32> -> vector<8x1xf32>
    %138 = vector.broadcast %137 : vector<8x1xf32> to vector<8x8xf32>
    %139 = arith.mulf %134, %138 : vector<8x8xf32>
    %cst_48 = arith.constant dense<0.000000e+00> : vector<8x16xf32>
    %140 = tpu.matmul %139, %126, %cst_48 {dimension_numbers = #tpu.dot_dimension_numbers<[1], [0], [0], [1], [0, 0, 1, 1], [], []>} : vector<8x8xf32>, vector<8x16xf32>, vector<8x16xf32> -> vector<8x16xf32>
    %141 = arith.truncf %140 : vector<8x16xf32> to vector<8x16xbf16>
    %c8_49 = arith.constant 8 : index
    %c32_50 = arith.constant 32 : index
    %142 = vector.load %arg6[%c8_49, %c32_50] : memref<16x128xbf16, #tpu.memory_space<vmem>>, vector<8x16xbf16>
    tpu.vector_store %arg6[%c8_49, %c32_50], %141 {strides = array<i32>} : memref<16x128xbf16, #tpu.memory_space<vmem>>, vector<8x16xbf16>,
    %143 = vector.extract_strided_slice %4 {offsets = [8, 48], sizes = [8, 16], strides = [1, 1]} : vector<16x256xf32> to vector<8x16xf32>
    %144 = vector.extract_strided_slice %4 {offsets = [8, 112], sizes = [8, 16], strides = [1, 1]} : vector<16x256xf32> to vector<8x16xf32>
    %145 = vector.extract_strided_slice %4 {offsets = [8, 176], sizes = [8, 16], strides = [1, 1]} : vector<16x256xf32> to vector<8x16xf32>
    %cst_51 = arith.constant dense<0.000000e+00> : vector<8x8xf32>
    %146 = tpu.matmul %143, %144, %cst_51 {dimension_numbers = #tpu.dot_dimension_numbers<[1], [1], [0], [0], [0, 0, 1, 0], [], []>} : vector<8x16xf32>, vector<8x16xf32>, vector<8x8xf32> -> vector<8x8xf32>
    %cst_52 = arith.constant -1.000000e+30 : f32
    %147 = vector.broadcast %cst_52 : f32 to vector<8x8xf32>
    %148 = arith.select %9, %146, %147 : vector<8x8xi1>, vector<8x8xf32>
    %cst_53 = arith.constant dense<0xFF800000> : vector<8xf32>
    %149 = vector.multi_reduction <maximumf>, %148, %cst_53 [1] : vector<8x8xf32> to vector<8xf32>
    %150 = vector.shape_cast %149 : vector<8xf32> to vector<8x1xf32>
    %151 = vector.broadcast %150 : vector<8x1xf32> to vector<8x8xf32>
    %152 = arith.subf %148, %151 : vector<8x8xf32>
    %153 = math.exp %152 : vector<8x8xf32>
    %cst_54 = arith.constant dense<0.000000e+00> : vector<8xf32>
    %154 = vector.multi_reduction <add>, %153, %cst_54 [1] : vector<8x8xf32> to vector<8xf32>
    %155 = vector.shape_cast %154 : vector<8xf32> to vector<8x1xf32>
    %156 = tpu.reciprocal %155 {approx = true} : vector<8x1xf32> -> vector<8x1xf32>
    %157 = vector.broadcast %156 : vector<8x1xf32> to vector<8x8xf32>
    %158 = arith.mulf %153, %157 : vector<8x8xf32>
    %cst_55 = arith.constant dense<0.000000e+00> : vector<8x16xf32>
    %159 = tpu.matmul %158, %145, %cst_55 {dimension_numbers = #tpu.dot_dimension_numbers<[1], [0], [0], [1], [0, 0, 1, 1], [], []>} : vector<8x8xf32>, vector<8x16xf32>, vector<8x16xf32> -> vector<8x16xf32>
    %160 = arith.truncf %159 : vector<8x16xf32> to vector<8x16xbf16>
    %c8_56 = arith.constant 8 : index
    %c48_57 = arith.constant 48 : index
    %161 = vector.load %arg6[%c8_56, %c48_57] : memref<16x128xbf16, #tpu.memory_space<vmem>>, vector<8x16xbf16>
    tpu.vector_store %arg6[%c8_56, %c48_57], %160 {strides = array<i32>} : memref<16x128xbf16, #tpu.memory_space<vmem>>, vector<8x16xbf16>,
    %c0_58 = arith.constant 0 : index
    %c0_59 = arith.constant 0 : index
    %162 = vector.load %arg6[%c0_58, %c0_59] : memref<16x128xbf16, #tpu.memory_space<vmem>>, vector<16x128xbf16>
    %c0_60 = arith.constant 0 : index
    %c0_61 = arith.constant 0 : index
    %163 = vector.load %arg3[%c0_60, %c0_61] : memref<128x16xbf16, #tpu.memory_space<vmem>>, vector<128x16xbf16>
    %cst_62 = arith.constant dense<0.000000e+00> : vector<16x16xf32>
    %164 = tpu.matmul %162, %163, %cst_62 {dimension_numbers = #tpu.dot_dimension_numbers<[1], [0], [0], [1], [0, 0, 1, 1], [], []>} : vector<16x128xbf16>, vector<128x16xbf16>, vector<16x16xf32> -> vector<16x16xf32>
    %c0_63 = arith.constant 0 : index
    %c0_64 = arith.constant 0 : index
    %165 = vector.load %arg4[%c0_63, %c0_64] : memref<1x16xf32, #tpu.memory_space<vmem>>, vector<1x16xf32>
    %166 = vector.broadcast %165 : vector<1x16xf32> to vector<16x16xf32>
    %167 = arith.addf %164, %166 : vector<16x16xf32>
    %168 = vector.shape_cast %167 : vector<16x16xf32> to vector<2x8x16xf32>
    %169 = arith.truncf %168 : vector<2x8x16xf32> to vector<2x8x16xbf16>
    %c0_65 = arith.constant 0 : index
    %c0_66 = arith.constant 0 : index
    %c0_67 = arith.constant 0 : index
    %170 = vector.load %arg5[%c0_65, %c0_66, %c0_67] : memref<2x8x16xbf16, #tpu.memory_space<vmem>>, vector<2x8x16xbf16>
    tpu.vector_store %arg5[%c0_65, %c0_66, %c0_67], %169 {strides = array<i32>} : memref<2x8x16xbf16, #tpu.memory_space<vmem>>, vector<2x8x16xbf16>,
    return
  }
  func.func @transform_0(%arg0: i32) -> (i32, i32, i32) {
    %c0_i32 = arith.constant 0 : i32
    %c0_i32_0 = arith.constant 0 : i32
    %c0_i32_1 = arith.constant 0 : i32
    return %arg0, %c0_i32, %c0_i32_0 : i32, i32, i32
  }
  func.func @transform_1(%arg0: i32) -> (i32, i32) {
    %c0_i32 = arith.constant 0 : i32
    %c0_i32_0 = arith.constant 0 : i32
    %c0_i32_1 = arith.constant 0 : i32
    return %c0_i32, %c0_i32_0 : i32, i32
  }
  func.func @transform_2(%arg0: i32) -> (i32, i32) {
    %c0_i32 = arith.constant 0 : i32
    %c0_i32_0 = arith.constant 0 : i32
    %c0_i32_1 = arith.constant 0 : i32
    return %c0_i32, %c0_i32_0 : i32, i32
  }
  func.func @transform_3(%arg0: i32) -> (i32, i32) {
    %c0_i32 = arith.constant 0 : i32
    %c0_i32_0 = arith.constant 0 : i32
    %c0_i32_1 = arith.constant 0 : i32
    return %c0_i32, %c0_i32_0 : i32, i32
  }
  func.func @transform_4(%arg0: i32) -> (i32, i32, i32) {
    %c0_i32 = arith.constant 0 : i32
    %c0_i32_0 = arith.constant 0 : i32
    %c0_i32_1 = arith.constant 0 : i32
    return %arg0, %c0_i32, %c0_i32_0 : i32, i32, i32
  }
}

</mosaic_0001>

<llo_original>
// kernel: tpu_custom_call.1
$region0: #{tpu_custom_call.1}
  #allocation0 [shape = 'u32[]', space=smem, size = 0x4, offset = 0x4, fixed_abs, tag = 'smem constant byte address 0x4 - core index']
  #allocation1 [shape = 'u32[144,128]{1,0:T(1,128)}', space=vmem, size = 0x12000, scoped, tag = 'internal scratch']
  #allocation2 [shape = 'bf16[16,128]{1,0:T(16,128)(2,1)}', space=vmem, size = 0x1000, scoped, tag = 'scratch operand']
  %s0 = inlined_call_operand.vmem [shape: f32[2,8,16], index: 0, kind: input, shape index: {}]
  %s1 = inlined_call_operand.vmem [shape: bf16[16,256], index: 1, kind: input, shape index: {}]
  %s2 = inlined_call_operand.vmem [shape: bf16[128,16], index: 2, kind: input, shape index: {}]
  %s3 = inlined_call_operand.vmem [shape: f32[1,16], index: 3, kind: input, shape index: {}]
  %s4 = inlined_call_operand.hbm [shape: bf16[2,8,16], index: 4, kind: output, shape index: {}]
  %s5 = sld [smem:[#allocation0]]
  $region26: #{tpu_custom_call.1} parent=0
    _
  %s7 = ssub.s32 1, %s5
  %s8 = scalar_select 0, %s7, %s5
  $region1: #{tpu_custom_call.1} parent=0
    #allocation3 [shape = 'u8[4096]{0}', space=vmem, size = 0x1000, scoped, tag = 'output window, operand 0, single buffered']
    #allocation4 [shape = 's32[1]{0}', space=sflag, size = 0x4, scoped, tag = 'scoped memory for tpu_custom_call.1']
    %9 = vsyncpa [#allocation4], 0
    // Predicated region
    $region2: #{tpu_custom_call.1} parent=1 // pred_check
      _
    $region3: #{tpu_custom_call.1} parent=1 // pred_check_branch
      %11 = sbr.rel (0) target = $region5
    $region4: #{tpu_custom_call.1} parent=1 // pred_region
      _
    $region5: #{tpu_custom_call.1} parent=1 // pred_fallthru
      _
    // Predicated region
    $region6: #{tpu_custom_call.1} parent=1 // pred_check
      _
    $region7: #{tpu_custom_call.1} parent=1 // pred_check_branch
      %13 = sbr.rel (0) target = $region9
    $region8: #{tpu_custom_call.1} parent=1 // pred_region
      _
    $region9: #{tpu_custom_call.1} parent=1 // pred_fallthru
      _
    // Predicated region
    $region10: #{tpu_custom_call.1} parent=1 // pred_check
      _
    $region11: #{tpu_custom_call.1} parent=1 // pred_check_branch
      %15 = sbr.rel (0) target = $region13
    $region12: #{tpu_custom_call.1} parent=1 // pred_region
      _
    $region13: #{tpu_custom_call.1} parent=1 // pred_fallthru
      _
    // Predicated region
    $region14: #{tpu_custom_call.1} parent=1 // pred_check
      _
    $region15: #{tpu_custom_call.1} parent=1 // pred_check_branch
      %17 = sbr.rel (0) target = $region17
    $region16: #{tpu_custom_call.1} parent=1 // pred_region
      _
    $region17: #{tpu_custom_call.1} parent=1 // pred_fallthru
      _
    %v19 = vld [vmem:[%s0] sm:$0xff]
    %v20 = vld [vmem:[%s0 + $0x8] sm:$0xff]
    %v21 = vpack.c.bf16 %v20, %v19
    %v22 = vld [vmem:[%s1] sm:$0xff]
    %v23 = vld [vmem:[%s1 + $0x8] sm:$0xff]
    %v26 = vunpack.c.l.b16 %v22
    %v27 = vunpack.c.h.b16 %v22
    %v28 = vunpack.c.l.b16 %v23
    %v29 = vunpack.c.h.b16 %v23
    %v30 = vpack.c.b16 %v28, %v26
    %v31 = vpack.c.b16 %v29, %v27
    %vm34 = vcmask 130048
    %v36 = vsel %vm34, %v21, 0
    %38 = vmatprep.subr.bf16.mxu0 %v31
    %39 = vmatpush1.bf16.msra.mxu0 %v30
    %40 = vmatprep.subr.bf16.mxu0 0
    %41 = vmatpush1.bf16.msra.mxu0 0
    %42 = vmatprep.subr.bf16.mxu0 0
    %43 = vmatpush1.bf16.msra.mxu0 0
    %44 = vmatprep.subr.bf16.mxu0 0
    %45 = vmatpush1.bf16.msra.mxu0 0
    %46 = vmatprep.subr.bf16.mxu0 0
    %47 = vmatpush1.bf16.msra.mxu0 0
    %48 = vmatprep.subr.bf16.mxu0 0
    %49 = vmatpush1.bf16.msra.mxu0 0
    %50 = vmatprep.subr.bf16.mxu0 0
    %51 = vmatpush1.bf16.msra.mxu0 0
    %52 = vmatprep.subr.bf16.mxu0 0
    %53 = vmatpush1.bf16.msra.mxu0 0
    %54 = vmatprep.subr.bf16.mxu0 0
    %55 = vmatpush1.bf16.msra.mxu0 0
    %56 = vmatprep.subr.bf16.mxu0 0
    %57 = vmatpush1.bf16.msra.mxu0 0
    %58 = vmatprep.subr.bf16.mxu0 0
    %59 = vmatpush1.bf16.msra.mxu0 0
    %60 = vmatprep.subr.bf16.mxu0 0
    %61 = vmatpush1.bf16.msra.mxu0 0
    %62 = vmatprep.subr.bf16.mxu0 0
    %63 = vmatpush1.bf16.msra.mxu0 0
    %64 = vmatprep.subr.bf16.mxu0 0
    %65 = vmatpush1.bf16.msra.mxu0 0
    %66 = vmatprep.subr.bf16.mxu0 0
    %67 = vmatpush1.bf16.msra.mxu0 0
    %68 = vmatprep.subr.bf16.mxu0 0
    %69 = vmatpush1.bf16.msra.mxu0 0
    %70 = vmatprep.mubr.bf16.mxu0 0
    %71 = vmatmul.mubr.bf16.gmra.mrb[0].mxu0 %v36
    %v72 = vpop.f32.mrb[0].mxu0
    %v73 = vadd.f32 0.0, %v72
    %v74 = vpop.f32.mrb[0].mxu0
    %v75 = vadd.f32 0.0, %v74
    %v76 = vpop.f32.mrb[0].mxu0
    %v77 = vadd.f32 0.0, %v76
    %v78 = vpop.f32.mrb[0].mxu0
    %v79 = vadd.f32 0.0, %v78
    %80 = vdwg.mxu0
    %vm81 = vcmask 1048064
    %82 = vst.msk [vmem:[#allocation2] sm:$0xff] %vm81, 0
    %v83 = vlaneseq
    %v84 = vshrl.u32 %v83, 7
    %v85 = vlaneseq
    %v86 = vand.u32 %v85, 127
    %vm87 = vcmp.le.s32.totalorder %v86, %v84
    %89 = vrot.lane.b32.xlu0 %v73, 64
    %v90 = vpop.permute.xlu0 %89
    %v91 = vsel %vm34, %v73, 0
    %v93 = vsel %vm34, %v90, 0
    %95 = vmatprep.subr.mxu0 0.0
    %96 = vmatpush1.xpose.msra.mxu0 %v93
    %97 = vmatprep.subr.mxu0 0.0
    %98 = vmatpush1.xpose.msra.mxu0 0.0
    %99 = vmatprep.subr.mxu0 0.0
    %100 = vmatpush1.xpose.msra.mxu0 0.0
    %101 = vmatprep.subr.mxu0 0.0
    %102 = vmatpush1.xpose.msra.mxu0 0.0
    %103 = vmatprep.subr.mxu0 0.0
    %104 = vmatpush1.xpose.msra.mxu0 0.0
    %105 = vmatprep.subr.mxu0 0.0
    %106 = vmatpush1.xpose.msra.mxu0 0.0
    %107 = vmatprep.subr.mxu0 0.0
    %108 = vmatpush1.xpose.msra.mxu0 0.0
    %109 = vmatprep.subr.mxu0 0.0
    %110 = vmatpush1.xpose.msra.mxu0 0.0
    %111 = vmatprep.subr.mxu0 0.0
    %112 = vmatpush1.xpose.msra.mxu0 0.0
    %113 = vmatprep.subr.mxu0 0.0
    %114 = vmatpush1.xpose.msra.mxu0 0.0
    %115 = vmatprep.subr.mxu0 0.0
    %116 = vmatpush1.xpose.msra.mxu0 0.0
    %117 = vmatprep.subr.mxu0 0.0
    %118 = vmatpush1.xpose.msra.mxu0 0.0
    %119 = vmatprep.subr.mxu0 0.0
    %120 = vmatpush1.xpose.msra.mxu0 0.0
    %121 = vmatprep.subr.mxu0 0.0
    %122 = vmatpush1.xpose.msra.mxu0 0.0
    %123 = vmatprep.subr.mxu0 0.0
    %124 = vmatpush1.xpose.msra.mxu0 0.0
    %125 = vmatprep.subr.mxu0 0.0
    %126 = vmatpush1.xpose.msra.mxu0 0.0
    %127 = vmatprep.subr.mxu0 0.0
    %128 = vmatpush1.xpose.msra.mxu0 0.0
    %129 = vmatprep.subr.mxu0 0.0
    %130 = vmatpush1.xpose.msra.mxu0 0.0
    %131 = vmatprep.subr.mxu0 0.0
    %132 = vmatpush1.xpose.msra.mxu0 0.0
    %133 = vmatprep.subr.mxu0 0.0
    %134 = vmatpush1.xpose.msra.mxu0 0.0
    %135 = vmatprep.subr.mxu0 0.0
    %136 = vmatpush1.xpose.msra.mxu0 0.0
    %137 = vmatprep.subr.mxu0 0.0
    %138 = vmatpush1.xpose.msra.mxu0 0.0
    %139 = vmatprep.subr.mxu0 0.0
    %140 = vmatpush1.xpose.msra.mxu0 0.0
    %141 = vmatprep.subr.mxu0 0.0
    %142 = vmatpush1.xpose.msra.mxu0 0.0
    %143 = vmatprep.subr.mxu0 0.0
    %144 = vmatpush1.xpose.msra.mxu0 0.0
    %145 = vmatprep.subr.mxu0 0.0
    %146 = vmatpush1.xpose.msra.mxu0 0.0
    %147 = vmatprep.subr.mxu0 0.0
    %148 = vmatpush1.xpose.msra.mxu0 0.0
    %149 = vmatprep.subr.mxu0 0.0
    %150 = vmatpush1.xpose.msra.mxu0 0.0
    %151 = vmatprep.subr.mxu0 0.0
    %152 = vmatpush1.xpose.msra.mxu0 0.0
    %153 = vmatprep.subr.mxu0 0.0
    %154 = vmatpush1.xpose.msra.mxu0 0.0
    %155 = vmatprep.subr.mxu0 0.0
    %156 = vmatpush1.xpose.msra.mxu0 0.0
    %157 = vmatprep.subr.mxu0 0.0
    %158 = vmatpush1.xpose.msra.mxu0 0.0
    %159 = vmatprep.mubr.f32.mxu0 0.0
    %160 = vmatmul.mubr.f32.gmra.mrb[0].mxu0 %v91
    %v161 = vpop.f32.mrb[0].mxu0
    %v162 = vadd.f32 0.0, %v161
    %v163 = vpop.f32.mrb[0].mxu0
    %164 = vdwg.mxu0
    %v165 = vsel %vm87, %v162, -1e+30
    %vm166 = vcmask 64512
    %v167 = vsel %vm166, %v165, -inf
    %168 = vmax.xlane.f32.xlu0 %v167
    %v169 = vpop.xlane.xlu0 %168
    %v170 = vsub.f32 %v165, %v169
    %v171 = vmul.f32 %v170, 1.442695
    %v172 = vpow.pop %v171
    %v173 = vsel %vm166, %v172, 0.0
    %174 = vadd.xlane.f32.xlu0 %v173
    %v175 = vpop.xlane.xlu0 %174
    %v176 = vrcp.pop %v175
    %v177 = vmul.f32 %v172, %v176
    %v179 = vsel %vm166, %v177, 0
    %181 = vmatprep.subr.mxu0 0.0
    %182 = vmatpush1.msra.mxu0 %v75
    %183 = vmatprep.subr.mxu0 0.0
    %184 = vmatpush1.msra.mxu0 0.0
    %185 = vmatprep.subr.mxu0 0.0
    %186 = vmatpush1.msra.mxu0 0.0
    %187 = vmatprep.subr.mxu0 0.0
    %188 = vmatpush1.msra.mxu0 0.0
    %189 = vmatprep.subr.mxu0 0.0
    %190 = vmatpush1.msra.mxu0 0.0
    %191 = vmatprep.subr.mxu0 0.0
    %192 = vmatpush1.msra.mxu0 0.0
    %193 = vmatprep.subr.mxu0 0.0
    %194 = vmatpush1.msra.mxu0 0.0
    %195 = vmatprep.subr.mxu0 0.0
    %196 = vmatpush1.msra.mxu0 0.0
    %197 = vmatprep.subr.mxu0 0.0
    %198 = vmatpush1.msra.mxu0 0.0
    %199 = vmatprep.subr.mxu0 0.0
    %200 = vmatpush1.msra.mxu0 0.0
    %201 = vmatprep.subr.mxu0 0.0
    %202 = vmatpush1.msra.mxu0 0.0
    %203 = vmatprep.subr.mxu0 0.0
    %204 = vmatpush1.msra.mxu0 0.0
    %205 = vmatprep.subr.mxu0 0.0
    %206 = vmatpush1.msra.mxu0 0.0
    %207 = vmatprep.subr.mxu0 0.0
    %208 = vmatpush1.msra.mxu0 0.0
    %209 = vmatprep.subr.mxu0 0.0
    %210 = vmatpush1.msra.mxu0 0.0
    %211 = vmatprep.subr.mxu0 0.0
    %212 = vmatpush1.msra.mxu0 0.0
    %213 = vmatprep.subr.mxu0 0.0
    %214 = vmatpush1.msra.mxu0 0.0
    %215 = vmatprep.subr.mxu0 0.0
    %216 = vmatpush1.msra.mxu0 0.0
    %217 = vmatprep.subr.mxu0 0.0
    %218 = vmatpush1.msra.mxu0 0.0
    %219 = vmatprep.subr.mxu0 0.0
    %220 = vmatpush1.msra.mxu0 0.0
    %221 = vmatprep.subr.mxu0 0.0
    %222 = vmatpush1.msra.mxu0 0.0
    %223 = vmatprep.subr.mxu0 0.0
    %224 = vmatpush1.msra.mxu0 0.0
    %225 = vmatprep.subr.mxu0 0.0
    %226 = vmatpush1.msra.mxu0 0.0
    %227 = vmatprep.subr.mxu0 0.0
    %228 = vmatpush1.msra.mxu0 0.0
    %229 = vmatprep.subr.mxu0 0.0
    %230 = vmatpush1.msra.mxu0 0.0
    %231 = vmatprep.subr.mxu0 0.0
    %232 = vmatpush1.msra.mxu0 0.0
    %233 = vmatprep.subr.mxu0 0.0
    %234 = vmatpush1.msra.mxu0 0.0
    %235 = vmatprep.subr.mxu0 0.0
    %236 = vmatpush1.msra.mxu0 0.0
    %237 = vmatprep.subr.mxu0 0.0
    %238 = vmatpush1.msra.mxu0 0.0
    %239 = vmatprep.subr.mxu0 0.0
    %240 = vmatpush1.msra.mxu0 0.0
    %241 = vmatprep.subr.mxu0 0.0
    %242 = vmatpush1.msra.mxu0 0.0
    %243 = vmatprep.subr.mxu0 0.0
    %244 = vmatpush1.msra.mxu0 0.0
    %245 = vmatprep.mubr.f32.mxu0 0.0
    %246 = vmatmul.mubr.f32.gmra.mrb[0].mxu0 %v179
    %v247 = vpop.f32.mrb[0].mxu0
    %v248 = vadd.f32 0.0, %v247
    %v249 = vpop.f32.mrb[0].mxu0
    %250 = vdwg.mxu0
    %v251 = vpack.c.bf16 %v248, %v248
    %vm252 = vcmask 125952
    %253 = vst.msk [vmem:[#allocation2] sm:$0xf] %vm252, %v251
    %254 = vrot.lane.b32.xlu0 %v73, 112
    %v255 = vpop.permute.xlu0 %254
    %256 = vrot.lane.b32.xlu0 %v73, 48
    %v257 = vpop.permute.xlu0 %256
    %v258 = vsel %vm34, %v255, 0
    %v260 = vsel %vm34, %v257, 0
    %262 = vmatprep.subr.mxu0 0.0
    %263 = vmatpush1.xpose.msra.mxu0 %v260
    %264 = vmatprep.subr.mxu0 0.0
    %265 = vmatpush1.xpose.msra.mxu0 0.0
    %266 = vmatprep.subr.mxu0 0.0
    %267 = vmatpush1.xpose.msra.mxu0 0.0
    %268 = vmatprep.subr.mxu0 0.0
    %269 = vmatpush1.xpose.msra.mxu0 0.0
    %270 = vmatprep.subr.mxu0 0.0
    %271 = vmatpush1.xpose.msra.mxu0 0.0
    %272 = vmatprep.subr.mxu0 0.0
    %273 = vmatpush1.xpose.msra.mxu0 0.0
    %274 = vmatprep.subr.mxu0 0.0
    %275 = vmatpush1.xpose.msra.mxu0 0.0
    %276 = vmatprep.subr.mxu0 0.0
    %277 = vmatpush1.xpose.msra.mxu0 0.0
    %278 = vmatprep.subr.mxu0 0.0
    %279 = vmatpush1.xpose.msra.mxu0 0.0
    %280 = vmatprep.subr.mxu0 0.0
    %281 = vmatpush1.xpose.msra.mxu0 0.0
    %282 = vmatprep.subr.mxu0 0.0
    %283 = vmatpush1.xpose.msra.mxu0 0.0
    %284 = vmatprep.subr.mxu0 0.0
    %285 = vmatpush1.xpose.msra.mxu0 0.0
    %286 = vmatprep.subr.mxu0 0.0
    %287 = vmatpush1.xpose.msra.mxu0 0.0
    %288 = vmatprep.subr.mxu0 0.0
    %289 = vmatpush1.xpose.msra.mxu0 0.0
    %290 = vmatprep.subr.mxu0 0.0
    %291 = vmatpush1.xpose.msra.mxu0 0.0
    %292 = vmatprep.subr.mxu0 0.0
    %293 = vmatpush1.xpose.msra.mxu0 0.0
    %294 = vmatprep.subr.mxu0 0.0
    %295 = vmatpush1.xpose.msra.mxu0 0.0
    %296 = vmatprep.subr.mxu0 0.0
    %297 = vmatpush1.xpose.msra.mxu0 0.0
    %298 = vmatprep.subr.mxu0 0.0
    %299 = vmatpush1.xpose.msra.mxu0 0.0
    %300 = vmatprep.subr.mxu0 0.0
    %301 = vmatpush1.xpose.msra.mxu0 0.0
    %302 = vmatprep.subr.mxu0 0.0
    %303 = vmatpush1.xpose.msra.mxu0 0.0
    %304 = vmatprep.subr.mxu0 0.0
    %305 = vmatpush1.xpose.msra.mxu0 0.0
    %306 = vmatprep.subr.mxu0 0.0
    %307 = vmatpush1.xpose.msra.mxu0 0.0
    %308 = vmatprep.subr.mxu0 0.0
    %309 = vmatpush1.xpose.msra.mxu0 0.0
    %310 = vmatprep.subr.mxu0 0.0
    %311 = vmatpush1.xpose.msra.mxu0 0.0
    %312 = vmatprep.subr.mxu0 0.0
    %313 = vmatpush1.xpose.msra.mxu0 0.0
    %314 = vmatprep.subr.mxu0 0.0
    %315 = vmatpush1.xpose.msra.mxu0 0.0
    %316 = vmatprep.subr.mxu0 0.0
    %317 = vmatpush1.xpose.msra.mxu0 0.0
    %318 = vmatprep.subr.mxu0 0.0
    %319 = vmatpush1.xpose.msra.mxu0 0.0
    %320 = vmatprep.subr.mxu0 0.0
    %321 = vmatpush1.xpose.msra.mxu0 0.0
    %322 = vmatprep.subr.mxu0 0.0
    %323 = vmatpush1.xpose.msra.mxu0 0.0
    %324 = vmatprep.subr.mxu0 0.0
    %325 = vmatpush1.xpose.msra.mxu0 0.0
    %326 = vmatprep.mubr.f32.mxu0 0.0
    %327 = vmatmul.mubr.f32.gmra.mrb[0].mxu0 %v258
    %v328 = vpop.f32.mrb[0].mxu0
    %v329 = vadd.f32 0.0, %v328
    %v330 = vpop.f32.mrb[0].mxu0
    %331 = vdwg.mxu0
    %v332 = vsel %vm87, %v329, -1e+30
    %v333 = vsel %vm166, %v332, -inf
    %334 = vmax.xlane.f32.xlu0 %v333
    %v335 = vpop.xlane.xlu0 %334
    %v336 = vsub.f32 %v332, %v335
    %v337 = vmul.f32 %v336, 1.442695
    %v338 = vpow.pop %v337
    %v339 = vsel %vm166, %v338, 0.0
    %340 = vadd.xlane.f32.xlu0 %v339
    %v341 = vpop.xlane.xlu0 %340
    %v342 = vrcp.pop %v341
    %v343 = vmul.f32 %v338, %v342
    %345 = vrot.lane.b32.xlu0 %v75, 112
    %v346 = vpop.permute.xlu0 %345
    %v349 = vsel %vm166, %v343, 0
    %351 = vmatprep.subr.mxu0 0.0
    %352 = vmatpush1.msra.mxu0 %v346
    %353 = vmatprep.subr.mxu0 0.0
    %354 = vmatpush1.msra.mxu0 0.0
    %355 = vmatprep.subr.mxu0 0.0
    %356 = vmatpush1.msra.mxu0 0.0
    %357 = vmatprep.subr.mxu0 0.0
    %358 = vmatpush1.msra.mxu0 0.0
    %359 = vmatprep.subr.mxu0 0.0
    %360 = vmatpush1.msra.mxu0 0.0
    %361 = vmatprep.subr.mxu0 0.0
    %362 = vmatpush1.msra.mxu0 0.0
    %363 = vmatprep.subr.mxu0 0.0
    %364 = vmatpush1.msra.mxu0 0.0
    %365 = vmatprep.subr.mxu0 0.0
    %366 = vmatpush1.msra.mxu0 0.0
    %367 = vmatprep.subr.mxu0 0.0
    %368 = vmatpush1.msra.mxu0 0.0
    %369 = vmatprep.subr.mxu0 0.0
    %370 = vmatpush1.msra.mxu0 0.0
    %371 = vmatprep.subr.mxu0 0.0
    %372 = vmatpush1.msra.mxu0 0.0
    %373 = vmatprep.subr.mxu0 0.0
    %374 = vmatpush1.msra.mxu0 0.0
    %375 = vmatprep.subr.mxu0 0.0
    %376 = vmatpush1.msra.mxu0 0.0
    %377 = vmatprep.subr.mxu0 0.0
    %378 = vmatpush1.msra.mxu0 0.0
    %379 = vmatprep.subr.mxu0 0.0
    %380 = vmatpush1.msra.mxu0 0.0
    %381 = vmatprep.subr.mxu0 0.0
    %382 = vmatpush1.msra.mxu0 0.0
    %383 = vmatprep.subr.mxu0 0.0
    %384 = vmatpush1.msra.mxu0 0.0
    %385 = vmatprep.subr.mxu0 0.0
    %386 = vmatpush1.msra.mxu0 0.0
    %387 = vmatprep.subr.mxu0 0.0
    %388 = vmatpush1.msra.mxu0 0.0
    %389 = vmatprep.subr.mxu0 0.0
    %390 = vmatpush1.msra.mxu0 0.0
    %391 = vmatprep.subr.mxu0 0.0
    %392 = vmatpush1.msra.mxu0 0.0
    %393 = vmatprep.subr.mxu0 0.0
    %394 = vmatpush1.msra.mxu0 0.0
    %395 = vmatprep.subr.mxu0 0.0
    %396 = vmatpush1.msra.mxu0 0.0
    %397 = vmatprep.subr.mxu0 0.0
    %398 = vmatpush1.msra.mxu0 0.0
    %399 = vmatprep.subr.mxu0 0.0
    %400 = vmatpush1.msra.mxu0 0.0
    %401 = vmatprep.subr.mxu0 0.0
    %402 = vmatpush1.msra.mxu0 0.0
    %403 = vmatprep.subr.mxu0 0.0
    %404 = vmatpush1.msra.mxu0 0.0
    %405 = vmatprep.subr.mxu0 0.0
    %406 = vmatpush1.msra.mxu0 0.0
    %407 = vmatprep.subr.mxu0 0.0
    %408 = vmatpush1.msra.mxu0 0.0
    %409 = vmatprep.subr.mxu0 0.0
    %410 = vmatpush1.msra.mxu0 0.0
    %411 = vmatprep.subr.mxu0 0.0
    %412 = vmatpush1.msra.mxu0 0.0
    %413 = vmatprep.subr.mxu0 0.0
    %414 = vmatpush1.msra.mxu0 0.0
    %415 = vmatprep.mubr.f32.mxu0 0.0
    %416 = vmatmul.mubr.f32.gmra.mrb[0].mxu0 %v349
    %v417 = vpop.f32.mrb[0].mxu0
    %v418 = vadd.f32 0.0, %v417
    %v419 = vpop.f32.mrb[0].mxu0
    %420 = vdwg.mxu0
    %v421 = vpack.c.bf16 %v418, %v418
    %423 = vrot.lane.b32.xlu0 %v421, 16
    %v424 = vpop.permute.xlu0 %423
    %vm426 = vcmask 257152
    %427 = vst.msk [vmem:[#allocation2] sm:$0xf] %vm426, %v424
    %428 = vrot.lane.b32.xlu0 %v73, 96
    %v429 = vpop.permute.xlu0 %428
    %430 = vrot.lane.b32.xlu0 %v73, 32
    %v431 = vpop.permute.xlu0 %430
    %v432 = vsel %vm34, %v429, 0
    %v434 = vsel %vm34, %v431, 0
    %436 = vmatprep.subr.mxu0 0.0
    %437 = vmatpush1.xpose.msra.mxu0 %v434
    %438 = vmatprep.subr.mxu0 0.0
    %439 = vmatpush1.xpose.msra.mxu0 0.0
    %440 = vmatprep.subr.mxu0 0.0
    %441 = vmatpush1.xpose.msra.mxu0 0.0
    %442 = vmatprep.subr.mxu0 0.0
    %443 = vmatpush1.xpose.msra.mxu0 0.0
    %444 = vmatprep.subr.mxu0 0.0
    %445 = vmatpush1.xpose.msra.mxu0 0.0
    %446 = vmatprep.subr.mxu0 0.0
    %447 = vmatpush1.xpose.msra.mxu0 0.0
    %448 = vmatprep.subr.mxu0 0.0
    %449 = vmatpush1.xpose.msra.mxu0 0.0
    %450 = vmatprep.subr.mxu0 0.0
    %451 = vmatpush1.xpose.msra.mxu0 0.0
    %452 = vmatprep.subr.mxu0 0.0
    %453 = vmatpush1.xpose.msra.mxu0 0.0
    %454 = vmatprep.subr.mxu0 0.0
    %455 = vmatpush1.xpose.msra.mxu0 0.0
    %456 = vmatprep.subr.mxu0 0.0
    %457 = vmatpush1.xpose.msra.mxu0 0.0
    %458 = vmatprep.subr.mxu0 0.0
    %459 = vmatpush1.xpose.msra.mxu0 0.0
    %460 = vmatprep.subr.mxu0 0.0
    %461 = vmatpush1.xpose.msra.mxu0 0.0
    %462 = vmatprep.subr.mxu0 0.0
    %463 = vmatpush1.xpose.msra.mxu0 0.0
    %464 = vmatprep.subr.mxu0 0.0
    %465 = vmatpush1.xpose.msra.mxu0 0.0
    %466 = vmatprep.subr.mxu0 0.0
    %467 = vmatpush1.xpose.msra.mxu0 0.0
    %468 = vmatprep.subr.mxu0 0.0
    %469 = vmatpush1.xpose.msra.mxu0 0.0
    %470 = vmatprep.subr.mxu0 0.0
    %471 = vmatpush1.xpose.msra.mxu0 0.0
    %472 = vmatprep.subr.mxu0 0.0
    %473 = vmatpush1.xpose.msra.mxu0 0.0
    %474 = vmatprep.subr.mxu0 0.0
    %475 = vmatpush1.xpose.msra.mxu0 0.0
    %476 = vmatprep.subr.mxu0 0.0
    %477 = vmatpush1.xpose.msra.mxu0 0.0
    %478 = vmatprep.subr.mxu0 0.0
    %479 = vmatpush1.xpose.msra.mxu0 0.0
    %480 = vmatprep.subr.mxu0 0.0
    %481 = vmatpush1.xpose.msra.mxu0 0.0
    %482 = vmatprep.subr.mxu0 0.0
    %483 = vmatpush1.xpose.msra.mxu0 0.0
    %484 = vmatprep.subr.mxu0 0.0
    %485 = vmatpush1.xpose.msra.mxu0 0.0
    %486 = vmatprep.subr.mxu0 0.0
    %487 = vmatpush1.xpose.msra.mxu0 0.0
    %488 = vmatprep.subr.mxu0 0.0
    %489 = vmatpush1.xpose.msra.mxu0 0.0
    %490 = vmatprep.subr.mxu0 0.0
    %491 = vmatpush1.xpose.msra.mxu0 0.0
    %492 = vmatprep.subr.mxu0 0.0
    %493 = vmatpush1.xpose.msra.mxu0 0.0
    %494 = vmatprep.subr.mxu0 0.0
    %495 = vmatpush1.xpose.msra.mxu0 0.0
    %496 = vmatprep.subr.mxu0 0.0
    %497 = vmatpush1.xpose.msra.mxu0 0.0
    %498 = vmatprep.subr.mxu0 0.0
    %499 = vmatpush1.xpose.msra.mxu0 0.0
    %500 = vmatprep.mubr.f32.mxu0 0.0
    %501 = vmatmul.mubr.f32.gmra.mrb[0].mxu0 %v432
    %v502 = vpop.f32.mrb[0].mxu0
    %v503 = vadd.f32 0.0, %v502
    %v504 = vpop.f32.mrb[0].mxu0
    %505 = vdwg.mxu0
    %v506 = vsel %vm87, %v503, -1e+30
    %v507 = vsel %vm166, %v506, -inf
    %508 = vmax.xlane.f32.xlu0 %v507
    %v509 = vpop.xlane.xlu0 %508
    %v510 = vsub.f32 %v506, %v509
    %v511 = vmul.f32 %v510, 1.442695
    %v512 = vpow.pop %v511
    %v513 = vsel %vm166, %v512, 0.0
    %514 = vadd.xlane.f32.xlu0 %v513
    %v515 = vpop.xlane.xlu0 %514
    %v516 = vrcp.pop %v515
    %v517 = vmul.f32 %v512, %v516
    %518 = vrot.lane.b32.xlu0 %v75, 96
    %v519 = vpop.permute.xlu0 %518
    %v522 = vsel %vm166, %v517, 0
    %524 = vmatprep.subr.mxu0 0.0
    %525 = vmatpush1.msra.mxu0 %v519
    %526 = vmatprep.subr.mxu0 0.0
    %527 = vmatpush1.msra.mxu0 0.0
    %528 = vmatprep.subr.mxu0 0.0
    %529 = vmatpush1.msra.mxu0 0.0
    %530 = vmatprep.subr.mxu0 0.0
    %531 = vmatpush1.msra.mxu0 0.0
    %532 = vmatprep.subr.mxu0 0.0
    %533 = vmatpush1.msra.mxu0 0.0
    %534 = vmatprep.subr.mxu0 0.0
    %535 = vmatpush1.msra.mxu0 0.0
    %536 = vmatprep.subr.mxu0 0.0
    %537 = vmatpush1.msra.mxu0 0.0
    %538 = vmatprep.subr.mxu0 0.0
    %539 = vmatpush1.msra.mxu0 0.0
    %540 = vmatprep.subr.mxu0 0.0
    %541 = vmatpush1.msra.mxu0 0.0
    %542 = vmatprep.subr.mxu0 0.0
    %543 = vmatpush1.msra.mxu0 0.0
    %544 = vmatprep.subr.mxu0 0.0
    %545 = vmatpush1.msra.mxu0 0.0
    %546 = vmatprep.subr.mxu0 0.0
    %547 = vmatpush1.msra.mxu0 0.0
    %548 = vmatprep.subr.mxu0 0.0
    %549 = vmatpush1.msra.mxu0 0.0
    %550 = vmatprep.subr.mxu0 0.0
    %551 = vmatpush1.msra.mxu0 0.0
    %552 = vmatprep.subr.mxu0 0.0
    %553 = vmatpush1.msra.mxu0 0.0
    %554 = vmatprep.subr.mxu0 0.0
    %555 = vmatpush1.msra.mxu0 0.0
    %556 = vmatprep.subr.mxu0 0.0
    %557 = vmatpush1.msra.mxu0 0.0
    %558 = vmatprep.subr.mxu0 0.0
    %559 = vmatpush1.msra.mxu0 0.0
    %560 = vmatprep.subr.mxu0 0.0
    %561 = vmatpush1.msra.mxu0 0.0
    %562 = vmatprep.subr.mxu0 0.0
    %563 = vmatpush1.msra.mxu0 0.0
    %564 = vmatprep.subr.mxu0 0.0
    %565 = vmatpush1.msra.mxu0 0.0
    %566 = vmatprep.subr.mxu0 0.0
    %567 = vmatpush1.msra.mxu0 0.0
    %568 = vmatprep.subr.mxu0 0.0
    %569 = vmatpush1.msra.mxu0 0.0
    %570 = vmatprep.subr.mxu0 0.0
    %571 = vmatpush1.msra.mxu0 0.0
    %572 = vmatprep.subr.mxu0 0.0
    %573 = vmatpush1.msra.mxu0 0.0
    %574 = vmatprep.subr.mxu0 0.0
    %575 = vmatpush1.msra.mxu0 0.0
    %576 = vmatprep.subr.mxu0 0.0
    %577 = vmatpush1.msra.mxu0 0.0
    %578 = vmatprep.subr.mxu0 0.0
    %579 = vmatpush1.msra.mxu0 0.0
    %580 = vmatprep.subr.mxu0 0.0
    %581 = vmatpush1.msra.mxu0 0.0
    %582 = vmatprep.subr.mxu0 0.0
    %583 = vmatpush1.msra.mxu0 0.0
    %584 = vmatprep.subr.mxu0 0.0
    %585 = vmatpush1.msra.mxu0 0.0
    %586 = vmatprep.subr.mxu0 0.0
    %587 = vmatpush1.msra.mxu0 0.0
    %588 = vmatprep.mubr.f32.mxu0 0.0
    %589 = vmatmul.mubr.f32.gmra.mrb[0].mxu0 %v522
    %v590 = vpop.f32.mrb[0].mxu0
    %v591 = vadd.f32 0.0, %v590
    %v592 = vpop.f32.mrb[0].mxu0
    %593 = vdwg.mxu0
    %v594 = vpack.c.bf16 %v591, %v591
    %596 = vrot.lane.b32.xlu0 %v594, 32
    %v597 = vpop.permute.xlu0 %596
    %vm599 = vcmask 388352
    %600 = vst.msk [vmem:[#allocation2] sm:$0xf] %vm599, %v597
    %601 = vrot.lane.b32.xlu0 %v73, 80
    %v602 = vpop.permute.xlu0 %601
    %603 = vrot.lane.b32.xlu0 %v73, 16
    %v604 = vpop.permute.xlu0 %603
    %v605 = vsel %vm34, %v602, 0
    %v607 = vsel %vm34, %v604, 0
    %609 = vmatprep.subr.mxu0 0.0
    %610 = vmatpush1.xpose.msra.mxu0 %v607
    %611 = vmatprep.subr.mxu0 0.0
    %612 = vmatpush1.xpose.msra.mxu0 0.0
    %613 = vmatprep.subr.mxu0 0.0
    %614 = vmatpush1.xpose.msra.mxu0 0.0
    %615 = vmatprep.subr.mxu0 0.0
    %616 = vmatpush1.xpose.msra.mxu0 0.0
    %617 = vmatprep.subr.mxu0 0.0
    %618 = vmatpush1.xpose.msra.mxu0 0.0
    %619 = vmatprep.subr.mxu0 0.0
    %620 = vmatpush1.xpose.msra.mxu0 0.0
    %621 = vmatprep.subr.mxu0 0.0
    %622 = vmatpush1.xpose.msra.mxu0 0.0
    %623 = vmatprep.subr.mxu0 0.0
    %624 = vmatpush1.xpose.msra.mxu0 0.0
    %625 = vmatprep.subr.mxu0 0.0
    %626 = vmatpush1.xpose.msra.mxu0 0.0
    %627 = vmatprep.subr.mxu0 0.0
    %628 = vmatpush1.xpose.msra.mxu0 0.0
    %629 = vmatprep.subr.mxu0 0.0
    %630 = vmatpush1.xpose.msra.mxu0 0.0
    %631 = vmatprep.subr.mxu0 0.0
    %632 = vmatpush1.xpose.msra.mxu0 0.0
    %633 = vmatprep.subr.mxu0 0.0
    %634 = vmatpush1.xpose.msra.mxu0 0.0
    %635 = vmatprep.subr.mxu0 0.0
    %636 = vmatpush1.xpose.msra.mxu0 0.0
    %637 = vmatprep.subr.mxu0 0.0
    %638 = vmatpush1.xpose.msra.mxu0 0.0
    %639 = vmatprep.subr.mxu0 0.0
    %640 = vmatpush1.xpose.msra.mxu0 0.0
    %641 = vmatprep.subr.mxu0 0.0
    %642 = vmatpush1.xpose.msra.mxu0 0.0
    %643 = vmatprep.subr.mxu0 0.0
    %644 = vmatpush1.xpose.msra.mxu0 0.0
    %645 = vmatprep.subr.mxu0 0.0
    %646 = vmatpush1.xpose.msra.mxu0 0.0
    %647 = vmatprep.subr.mxu0 0.0
    %648 = vmatpush1.xpose.msra.mxu0 0.0
    %649 = vmatprep.subr.mxu0 0.0
    %650 = vmatpush1.xpose.msra.mxu0 0.0
    %651 = vmatprep.subr.mxu0 0.0
    %652 = vmatpush1.xpose.msra.mxu0 0.0
    %653 = vmatprep.subr.mxu0 0.0
    %654 = vmatpush1.xpose.msra.mxu0 0.0
    %655 = vmatprep.subr.mxu0 0.0
    %656 = vmatpush1.xpose.msra.mxu0 0.0
    %657 = vmatprep.subr.mxu0 0.0
    %658 = vmatpush1.xpose.msra.mxu0 0.0
    %659 = vmatprep.subr.mxu0 0.0
    %660 = vmatpush1.xpose.msra.mxu0 0.0
    %661 = vmatprep.subr.mxu0 0.0
    %662 = vmatpush1.xpose.msra.mxu0 0.0
    %663 = vmatprep.subr.mxu0 0.0
    %664 = vmatpush1.xpose.msra.mxu0 0.0
    %665 = vmatprep.subr.mxu0 0.0
    %666 = vmatpush1.xpose.msra.mxu0 0.0
    %667 = vmatprep.subr.mxu0 0.0
    %668 = vmatpush1.xpose.msra.mxu0 0.0
    %669 = vmatprep.subr.mxu0 0.0
    %670 = vmatpush1.xpose.msra.mxu0 0.0
    %671 = vmatprep.subr.mxu0 0.0
    %672 = vmatpush1.xpose.msra.mxu0 0.0
    %673 = vmatprep.mubr.f32.mxu0 0.0
    %674 = vmatmul.mubr.f32.gmra.mrb[0].mxu0 %v605
    %v675 = vpop.f32.mrb[0].mxu0
    %v676 = vadd.f32 0.0, %v675
    %v677 = vpop.f32.mrb[0].mxu0
    %678 = vdwg.mxu0
    %v679 = vsel %vm87, %v676, -1e+30
    %v680 = vsel %vm166, %v679, -inf
    %681 = vmax.xlane.f32.xlu0 %v680
    %v682 = vpop.xlane.xlu0 %681
    %v683 = vsub.f32 %v679, %v682
    %v684 = vmul.f32 %v683, 1.442695
    %v685 = vpow.pop %v684
    %v686 = vsel %vm166, %v685, 0.0
    %687 = vadd.xlane.f32.xlu0 %v686
    %v688 = vpop.xlane.xlu0 %687
    %v689 = vrcp.pop %v688
    %v690 = vmul.f32 %v685, %v689
    %691 = vrot.lane.b32.xlu0 %v75, 80
    %v692 = vpop.permute.xlu0 %691
    %v695 = vsel %vm166, %v690, 0
    %697 = vmatprep.subr.mxu0 0.0
    %698 = vmatpush1.msra.mxu0 %v692
    %699 = vmatprep.subr.mxu0 0.0
    %700 = vmatpush1.msra.mxu0 0.0
    %701 = vmatprep.subr.mxu0 0.0
    %702 = vmatpush1.msra.mxu0 0.0
    %703 = vmatprep.subr.mxu0 0.0
    %704 = vmatpush1.msra.mxu0 0.0
    %705 = vmatprep.subr.mxu0 0.0
    %706 = vmatpush1.msra.mxu0 0.0
    %707 = vmatprep.subr.mxu0 0.0
    %708 = vmatpush1.msra.mxu0 0.0
    %709 = vmatprep.subr.mxu0 0.0
    %710 = vmatpush1.msra.mxu0 0.0
    %711 = vmatprep.subr.mxu0 0.0
    %712 = vmatpush1.msra.mxu0 0.0
    %713 = vmatprep.subr.mxu0 0.0
    %714 = vmatpush1.msra.mxu0 0.0
    %715 = vmatprep.subr.mxu0 0.0
    %716 = vmatpush1.msra.mxu0 0.0
    %717 = vmatprep.subr.mxu0 0.0
    %718 = vmatpush1.msra.mxu0 0.0
    %719 = vmatprep.subr.mxu0 0.0
    %720 = vmatpush1.msra.mxu0 0.0
    %721 = vmatprep.subr.mxu0 0.0
    %722 = vmatpush1.msra.mxu0 0.0
    %723 = vmatprep.subr.mxu0 0.0
    %724 = vmatpush1.msra.mxu0 0.0
    %725 = vmatprep.subr.mxu0 0.0
    %726 = vmatpush1.msra.mxu0 0.0
    %727 = vmatprep.subr.mxu0 0.0
    %728 = vmatpush1.msra.mxu0 0.0
    %729 = vmatprep.subr.mxu0 0.0
    %730 = vmatpush1.msra.mxu0 0.0
    %731 = vmatprep.subr.mxu0 0.0
    %732 = vmatpush1.msra.mxu0 0.0
    %733 = vmatprep.subr.mxu0 0.0
    %734 = vmatpush1.msra.mxu0 0.0
    %735 = vmatprep.subr.mxu0 0.0
    %736 = vmatpush1.msra.mxu0 0.0
    %737 = vmatprep.subr.mxu0 0.0
    %738 = vmatpush1.msra.mxu0 0.0
    %739 = vmatprep.subr.mxu0 0.0
    %740 = vmatpush1.msra.mxu0 0.0
    %741 = vmatprep.subr.mxu0 0.0
    %742 = vmatpush1.msra.mxu0 0.0
    %743 = vmatprep.subr.mxu0 0.0
    %744 = vmatpush1.msra.mxu0 0.0
    %745 = vmatprep.subr.mxu0 0.0
    %746 = vmatpush1.msra.mxu0 0.0
    %747 = vmatprep.subr.mxu0 0.0
    %748 = vmatpush1.msra.mxu0 0.0
    %749 = vmatprep.subr.mxu0 0.0
    %750 = vmatpush1.msra.mxu0 0.0
    %751 = vmatprep.subr.mxu0 0.0
    %752 = vmatpush1.msra.mxu0 0.0
    %753 = vmatprep.subr.mxu0 0.0
    %754 = vmatpush1.msra.mxu0 0.0
    %755 = vmatprep.subr.mxu0 0.0
    %756 = vmatpush1.msra.mxu0 0.0
    %757 = vmatprep.subr.mxu0 0.0
    %758 = vmatpush1.msra.mxu0 0.0
    %759 = vmatprep.subr.mxu0 0.0
    %760 = vmatpush1.msra.mxu0 0.0
    %761 = vmatprep.mubr.f32.mxu0 0.0
    %762 = vmatmul.mubr.f32.gmra.mrb[0].mxu0 %v695
    %v763 = vpop.f32.mrb[0].mxu0
    %v764 = vadd.f32 0.0, %v763
    %v765 = vpop.f32.mrb[0].mxu0
    %766 = vdwg.mxu0
    %v767 = vpack.c.bf16 %v764, %v764
    %769 = vrot.lane.b32.xlu0 %v767, 48
    %v770 = vpop.permute.xlu0 %769
    %vm772 = vcmask 519552
    %773 = vst.msk [vmem:[#allocation2] sm:$0xf] %vm772, %v770
    %775 = vrot.lane.b32.xlu0 %v77, 64
    %v776 = vpop.permute.xlu0 %775
    %v777 = vsel %vm34, %v77, 0
    %v779 = vsel %vm34, %v776, 0
    %781 = vmatprep.subr.mxu0 0.0
    %782 = vmatpush1.xpose.msra.mxu0 %v779
    %783 = vmatprep.subr.mxu0 0.0
    %784 = vmatpush1.xpose.msra.mxu0 0.0
    %785 = vmatprep.subr.mxu0 0.0
    %786 = vmatpush1.xpose.msra.mxu0 0.0
    %787 = vmatprep.subr.mxu0 0.0
    %788 = vmatpush1.xpose.msra.mxu0 0.0
    %789 = vmatprep.subr.mxu0 0.0
    %790 = vmatpush1.xpose.msra.mxu0 0.0
    %791 = vmatprep.subr.mxu0 0.0
    %792 = vmatpush1.xpose.msra.mxu0 0.0
    %793 = vmatprep.subr.mxu0 0.0
    %794 = vmatpush1.xpose.msra.mxu0 0.0
    %795 = vmatprep.subr.mxu0 0.0
    %796 = vmatpush1.xpose.msra.mxu0 0.0
    %797 = vmatprep.subr.mxu0 0.0
    %798 = vmatpush1.xpose.msra.mxu0 0.0
    %799 = vmatprep.subr.mxu0 0.0
    %800 = vmatpush1.xpose.msra.mxu0 0.0
    %801 = vmatprep.subr.mxu0 0.0
    %802 = vmatpush1.xpose.msra.mxu0 0.0
    %803 = vmatprep.subr.mxu0 0.0
    %804 = vmatpush1.xpose.msra.mxu0 0.0
    %805 = vmatprep.subr.mxu0 0.0
    %806 = vmatpush1.xpose.msra.mxu0 0.0
    %807 = vmatprep.subr.mxu0 0.0
    %808 = vmatpush1.xpose.msra.mxu0 0.0
    %809 = vmatprep.subr.mxu0 0.0
    %810 = vmatpush1.xpose.msra.mxu0 0.0
    %811 = vmatprep.subr.mxu0 0.0
    %812 = vmatpush1.xpose.msra.mxu0 0.0
    %813 = vmatprep.subr.mxu0 0.0
    %814 = vmatpush1.xpose.msra.mxu0 0.0
    %815 = vmatprep.subr.mxu0 0.0
    %816 = vmatpush1.xpose.msra.mxu0 0.0
    %817 = vmatprep.subr.mxu0 0.0
    %818 = vmatpush1.xpose.msra.mxu0 0.0
    %819 = vmatprep.subr.mxu0 0.0
    %820 = vmatpush1.xpose.msra.mxu0 0.0
    %821 = vmatprep.subr.mxu0 0.0
    %822 = vmatpush1.xpose.msra.mxu0 0.0
    %823 = vmatprep.subr.mxu0 0.0
    %824 = vmatpush1.xpose.msra.mxu0 0.0
    %825 = vmatprep.subr.mxu0 0.0
    %826 = vmatpush1.xpose.msra.mxu0 0.0
    %827 = vmatprep.subr.mxu0 0.0
    %828 = vmatpush1.xpose.msra.mxu0 0.0
    %829 = vmatprep.subr.mxu0 0.0
    %830 = vmatpush1.xpose.msra.mxu0 0.0
    %831 = vmatprep.subr.mxu0 0.0
    %832 = vmatpush1.xpose.msra.mxu0 0.0
    %833 = vmatprep.subr.mxu0 0.0
    %834 = vmatpush1.xpose.msra.mxu0 0.0
    %835 = vmatprep.subr.mxu0 0.0
    %836 = vmatpush1.xpose.msra.mxu0 0.0
    %837 = vmatprep.subr.mxu0 0.0
    %838 = vmatpush1.xpose.msra.mxu0 0.0
    %839 = vmatprep.subr.mxu0 0.0
    %840 = vmatpush1.xpose.msra.mxu0 0.0
    %841 = vmatprep.subr.mxu0 0.0
    %842 = vmatpush1.xpose.msra.mxu0 0.0
    %843 = vmatprep.subr.mxu0 0.0
    %844 = vmatpush1.xpose.msra.mxu0 0.0
    %845 = vmatprep.mubr.f32.mxu0 0.0
    %846 = vmatmul.mubr.f32.gmra.mrb[0].mxu0 %v777
    %v847 = vpop.f32.mrb[0].mxu0
    %v848 = vadd.f32 0.0, %v847
    %v849 = vpop.f32.mrb[0].mxu0
    %850 = vdwg.mxu0
    %v851 = vsel %vm87, %v848, -1e+30
    %v852 = vsel %vm166, %v851, -inf
    %853 = vmax.xlane.f32.xlu0 %v852
    %v854 = vpop.xlane.xlu0 %853
    %v855 = vsub.f32 %v851, %v854
    %v856 = vmul.f32 %v855, 1.442695
    %v857 = vpow.pop %v856
    %v858 = vsel %vm166, %v857, 0.0
    %859 = vadd.xlane.f32.xlu0 %v858
    %v860 = vpop.xlane.xlu0 %859
    %v861 = vrcp.pop %v860
    %v862 = vmul.f32 %v857, %v861
    %v864 = vsel %vm166, %v862, 0
    %866 = vmatprep.subr.mxu0 0.0
    %867 = vmatpush1.msra.mxu0 %v79
    %868 = vmatprep.subr.mxu0 0.0
    %869 = vmatpush1.msra.mxu0 0.0
    %870 = vmatprep.subr.mxu0 0.0
    %871 = vmatpush1.msra.mxu0 0.0
    %872 = vmatprep.subr.mxu0 0.0
    %873 = vmatpush1.msra.mxu0 0.0
    %874 = vmatprep.subr.mxu0 0.0
    %875 = vmatpush1.msra.mxu0 0.0
    %876 = vmatprep.subr.mxu0 0.0
    %877 = vmatpush1.msra.mxu0 0.0
    %878 = vmatprep.subr.mxu0 0.0
    %879 = vmatpush1.msra.mxu0 0.0
    %880 = vmatprep.subr.mxu0 0.0
    %881 = vmatpush1.msra.mxu0 0.0
    %882 = vmatprep.subr.mxu0 0.0
    %883 = vmatpush1.msra.mxu0 0.0
    %884 = vmatprep.subr.mxu0 0.0
    %885 = vmatpush1.msra.mxu0 0.0
    %886 = vmatprep.subr.mxu0 0.0
    %887 = vmatpush1.msra.mxu0 0.0
    %888 = vmatprep.subr.mxu0 0.0
    %889 = vmatpush1.msra.mxu0 0.0
    %890 = vmatprep.subr.mxu0 0.0
    %891 = vmatpush1.msra.mxu0 0.0
    %892 = vmatprep.subr.mxu0 0.0
    %893 = vmatpush1.msra.mxu0 0.0
    %894 = vmatprep.subr.mxu0 0.0
    %895 = vmatpush1.msra.mxu0 0.0
    %896 = vmatprep.subr.mxu0 0.0
    %897 = vmatpush1.msra.mxu0 0.0
    %898 = vmatprep.subr.mxu0 0.0
    %899 = vmatpush1.msra.mxu0 0.0
    %900 = vmatprep.subr.mxu0 0.0
    %901 = vmatpush1.msra.mxu0 0.0
    %902 = vmatprep.subr.mxu0 0.0
    %903 = vmatpush1.msra.mxu0 0.0
    %904 = vmatprep.subr.mxu0 0.0
    %905 = vmatpush1.msra.mxu0 0.0
    %906 = vmatprep.subr.mxu0 0.0
    %907 = vmatpush1.msra.mxu0 0.0
    %908 = vmatprep.subr.mxu0 0.0
    %909 = vmatpush1.msra.mxu0 0.0
    %910 = vmatprep.subr.mxu0 0.0
    %911 = vmatpush1.msra.mxu0 0.0
    %912 = vmatprep.subr.mxu0 0.0
    %913 = vmatpush1.msra.mxu0 0.0
    %914 = vmatprep.subr.mxu0 0.0
    %915 = vmatpush1.msra.mxu0 0.0
    %916 = vmatprep.subr.mxu0 0.0
    %917 = vmatpush1.msra.mxu0 0.0
    %918 = vmatprep.subr.mxu0 0.0
    %919 = vmatpush1.msra.mxu0 0.0
    %920 = vmatprep.subr.mxu0 0.0
    %921 = vmatpush1.msra.mxu0 0.0
    %922 = vmatprep.subr.mxu0 0.0
    %923 = vmatpush1.msra.mxu0 0.0
    %924 = vmatprep.subr.mxu0 0.0
    %925 = vmatpush1.msra.mxu0 0.0
    %926 = vmatprep.subr.mxu0 0.0
    %927 = vmatpush1.msra.mxu0 0.0
    %928 = vmatprep.subr.mxu0 0.0
    %929 = vmatpush1.msra.mxu0 0.0
    %930 = vmatprep.mubr.f32.mxu0 0.0
    %931 = vmatmul.mubr.f32.gmra.mrb[0].mxu0 %v864
    %v932 = vpop.f32.mrb[0].mxu0
    %v933 = vadd.f32 0.0, %v932
    %v934 = vpop.f32.mrb[0].mxu0
    %935 = vdwg.mxu0
    %v936 = vpack.c.bf16 %v933, %v933
    %v938 = vrot.slane %v936, 4
    %vm940 = vcmask 130052
    %941 = vst.msk [vmem:[#allocation2] sm:$0xf0] %vm940, %v938
    %942 = vrot.lane.b32.xlu0 %v77, 112
    %v943 = vpop.permute.xlu0 %942
    %944 = vrot.lane.b32.xlu0 %v77, 48
    %v945 = vpop.permute.xlu0 %944
    %v946 = vsel %vm34, %v943, 0
    %v948 = vsel %vm34, %v945, 0
    %950 = vmatprep.subr.mxu0 0.0
    %951 = vmatpush1.xpose.msra.mxu0 %v948
    %952 = vmatprep.subr.mxu0 0.0
    %953 = vmatpush1.xpose.msra.mxu0 0.0
    %954 = vmatprep.subr.mxu0 0.0
    %955 = vmatpush1.xpose.msra.mxu0 0.0
    %956 = vmatprep.subr.mxu0 0.0
    %957 = vmatpush1.xpose.msra.mxu0 0.0
    %958 = vmatprep.subr.mxu0 0.0
    %959 = vmatpush1.xpose.msra.mxu0 0.0
    %960 = vmatprep.subr.mxu0 0.0
    %961 = vmatpush1.xpose.msra.mxu0 0.0
    %962 = vmatprep.subr.mxu0 0.0
    %963 = vmatpush1.xpose.msra.mxu0 0.0
    %964 = vmatprep.subr.mxu0 0.0
    %965 = vmatpush1.xpose.msra.mxu0 0.0
    %966 = vmatprep.subr.mxu0 0.0
    %967 = vmatpush1.xpose.msra.mxu0 0.0
    %968 = vmatprep.subr.mxu0 0.0
    %969 = vmatpush1.xpose.msra.mxu0 0.0
    %970 = vmatprep.subr.mxu0 0.0
    %971 = vmatpush1.xpose.msra.mxu0 0.0
    %972 = vmatprep.subr.mxu0 0.0
    %973 = vmatpush1.xpose.msra.mxu0 0.0
    %974 = vmatprep.subr.mxu0 0.0
    %975 = vmatpush1.xpose.msra.mxu0 0.0
    %976 = vmatprep.subr.mxu0 0.0
    %977 = vmatpush1.xpose.msra.mxu0 0.0
    %978 = vmatprep.subr.mxu0 0.0
    %979 = vmatpush1.xpose.msra.mxu0 0.0
    %980 = vmatprep.subr.mxu0 0.0
    %981 = vmatpush1.xpose.msra.mxu0 0.0
    %982 = vmatprep.subr.mxu0 0.0
    %983 = vmatpush1.xpose.msra.mxu0 0.0
    %984 = vmatprep.subr.mxu0 0.0
    %985 = vmatpush1.xpose.msra.mxu0 0.0
    %986 = vmatprep.subr.mxu0 0.0
    %987 = vmatpush1.xpose.msra.mxu0 0.0
    %988 = vmatprep.subr.mxu0 0.0
    %989 = vmatpush1.xpose.msra.mxu0 0.0
    %990 = vmatprep.subr.mxu0 0.0
    %991 = vmatpush1.xpose.msra.mxu0 0.0
    %992 = vmatprep.subr.mxu0 0.0
    %993 = vmatpush1.xpose.msra.mxu0 0.0
    %994 = vmatprep.subr.mxu0 0.0
    %995 = vmatpush1.xpose.msra.mxu0 0.0
    %996 = vmatprep.subr.mxu0 0.0
    %997 = vmatpush1.xpose.msra.mxu0 0.0
    %998 = vmatprep.subr.mxu0 0.0
    %999 = vmatpush1.xpose.msra.mxu0 0.0
    %1000 = vmatprep.subr.mxu0 0.0
    %1001 = vmatpush1.xpose.msra.mxu0 0.0
    %1002 = vmatprep.subr.mxu0 0.0
    %1003 = vmatpush1.xpose.msra.mxu0 0.0
    %1004 = vmatprep.subr.mxu0 0.0
    %1005 = vmatpush1.xpose.msra.mxu0 0.0
    %1006 = vmatprep.subr.mxu0 0.0
    %1007 = vmatpush1.xpose.msra.mxu0 0.0
    %1008 = vmatprep.subr.mxu0 0.0
    %1009 = vmatpush1.xpose.msra.mxu0 0.0
    %1010 = vmatprep.subr.mxu0 0.0
    %1011 = vmatpush1.xpose.msra.mxu0 0.0
    %1012 = vmatprep.subr.mxu0 0.0
    %1013 = vmatpush1.xpose.msra.mxu0 0.0
    %1014 = vmatprep.mubr.f32.mxu0 0.0
    %1015 = vmatmul.mubr.f32.gmra.mrb[0].mxu0 %v946
    %v1016 = vpop.f32.mrb[0].mxu0
    %v1017 = vadd.f32 0.0, %v1016
    %v1018 = vpop.f32.mrb[0].mxu0
    %1019 = vdwg.mxu0
    %v1020 = vsel %vm87, %v1017, -1e+30
    %v1021 = vsel %vm166, %v1020, -inf
    %1022 = vmax.xlane.f32.xlu0 %v1021
    %v1023 = vpop.xlane.xlu0 %1022
    %v1024 = vsub.f32 %v1020, %v1023
    %v1025 = vmul.f32 %v1024, 1.442695
    %v1026 = vpow.pop %v1025
    %v1027 = vsel %vm166, %v1026, 0.0
    %1028 = vadd.xlane.f32.xlu0 %v1027
    %v1029 = vpop.xlane.xlu0 %1028
    %v1030 = vrcp.pop %v1029
    %v1031 = vmul.f32 %v1026, %v1030
    %1033 = vrot.lane.b32.xlu0 %v79, 112
    %v1034 = vpop.permute.xlu0 %1033
    %v1037 = vsel %vm166, %v1031, 0
    %1039 = vmatprep.subr.mxu0 0.0
    %1040 = vmatpush1.msra.mxu0 %v1034
    %1041 = vmatprep.subr.mxu0 0.0
    %1042 = vmatpush1.msra.mxu0 0.0
    %1043 = vmatprep.subr.mxu0 0.0
    %1044 = vmatpush1.msra.mxu0 0.0
    %1045 = vmatprep.subr.mxu0 0.0
    %1046 = vmatpush1.msra.mxu0 0.0
    %1047 = vmatprep.subr.mxu0 0.0
    %1048 = vmatpush1.msra.mxu0 0.0
    %1049 = vmatprep.subr.mxu0 0.0
    %1050 = vmatpush1.msra.mxu0 0.0
    %1051 = vmatprep.subr.mxu0 0.0
    %1052 = vmatpush1.msra.mxu0 0.0
    %1053 = vmatprep.subr.mxu0 0.0
    %1054 = vmatpush1.msra.mxu0 0.0
    %1055 = vmatprep.subr.mxu0 0.0
    %1056 = vmatpush1.msra.mxu0 0.0
    %1057 = vmatprep.subr.mxu0 0.0
    %1058 = vmatpush1.msra.mxu0 0.0
    %1059 = vmatprep.subr.mxu0 0.0
    %1060 = vmatpush1.msra.mxu0 0.0
    %1061 = vmatprep.subr.mxu0 0.0
    %1062 = vmatpush1.msra.mxu0 0.0
    %1063 = vmatprep.subr.mxu0 0.0
    %1064 = vmatpush1.msra.mxu0 0.0
    %1065 = vmatprep.subr.mxu0 0.0
    %1066 = vmatpush1.msra.mxu0 0.0
    %1067 = vmatprep.subr.mxu0 0.0
    %1068 = vmatpush1.msra.mxu0 0.0
    %1069 = vmatprep.subr.mxu0 0.0
    %1070 = vmatpush1.msra.mxu0 0.0
    %1071 = vmatprep.subr.mxu0 0.0
    %1072 = vmatpush1.msra.mxu0 0.0
    %1073 = vmatprep.subr.mxu0 0.0
    %1074 = vmatpush1.msra.mxu0 0.0
    %1075 = vmatprep.subr.mxu0 0.0
    %1076 = vmatpush1.msra.mxu0 0.0
    %1077 = vmatprep.subr.mxu0 0.0
    %1078 = vmatpush1.msra.mxu0 0.0
    %1079 = vmatprep.subr.mxu0 0.0
    %1080 = vmatpush1.msra.mxu0 0.0
    %1081 = vmatprep.subr.mxu0 0.0
    %1082 = vmatpush1.msra.mxu0 0.0
    %1083 = vmatprep.subr.mxu0 0.0
    %1084 = vmatpush1.msra.mxu0 0.0
    %1085 = vmatprep.subr.mxu0 0.0
    %1086 = vmatpush1.msra.mxu0 0.0
    %1087 = vmatprep.subr.mxu0 0.0
    %1088 = vmatpush1.msra.mxu0 0.0
    %1089 = vmatprep.subr.mxu0 0.0
    %1090 = vmatpush1.msra.mxu0 0.0
    %1091 = vmatprep.subr.mxu0 0.0
    %1092 = vmatpush1.msra.mxu0 0.0
    %1093 = vmatprep.subr.mxu0 0.0
    %1094 = vmatpush1.msra.mxu0 0.0
    %1095 = vmatprep.subr.mxu0 0.0
    %1096 = vmatpush1.msra.mxu0 0.0
    %1097 = vmatprep.subr.mxu0 0.0
    %1098 = vmatpush1.msra.mxu0 0.0
    %1099 = vmatprep.subr.mxu0 0.0
    %1100 = vmatpush1.msra.mxu0 0.0
    %1101 = vmatprep.subr.mxu0 0.0
    %1102 = vmatpush1.msra.mxu0 0.0
    %1103 = vmatprep.mubr.f32.mxu0 0.0
    %1104 = vmatmul.mubr.f32.gmra.mrb[0].mxu0 %v1037
    %v1105 = vpop.f32.mrb[0].mxu0
    %v1106 = vadd.f32 0.0, %v1105
    %v1107 = vpop.f32.mrb[0].mxu0
    %1108 = vdwg.mxu0
    %v1109 = vpack.c.bf16 %v1106, %v1106
    %v1111 = vrot.slane %v1109, 4
    %1112 = vrot.lane.b32.xlu0 %v1111, 16
    %v1113 = vpop.permute.xlu0 %1112
    %vm1115 = vcmask 261252
    %1116 = vst.msk [vmem:[#allocation2] sm:$0xf0] %vm1115, %v1113
    %1117 = vrot.lane.b32.xlu0 %v77, 96
    %v1118 = vpop.permute.xlu0 %1117
    %1119 = vrot.lane.b32.xlu0 %v77, 32
    %v1120 = vpop.permute.xlu0 %1119
    %v1121 = vsel %vm34, %v1118, 0
    %v1123 = vsel %vm34, %v1120, 0
    %1125 = vmatprep.subr.mxu0 0.0
    %1126 = vmatpush1.xpose.msra.mxu0 %v1123
    %1127 = vmatprep.subr.mxu0 0.0
    %1128 = vmatpush1.xpose.msra.mxu0 0.0
    %1129 = vmatprep.subr.mxu0 0.0
    %1130 = vmatpush1.xpose.msra.mxu0 0.0
    %1131 = vmatprep.subr.mxu0 0.0
    %1132 = vmatpush1.xpose.msra.mxu0 0.0
    %1133 = vmatprep.subr.mxu0 0.0
    %1134 = vmatpush1.xpose.msra.mxu0 0.0
    %1135 = vmatprep.subr.mxu0 0.0
    %1136 = vmatpush1.xpose.msra.mxu0 0.0
    %1137 = vmatprep.subr.mxu0 0.0
    %1138 = vmatpush1.xpose.msra.mxu0 0.0
    %1139 = vmatprep.subr.mxu0 0.0
    %1140 = vmatpush1.xpose.msra.mxu0 0.0
    %1141 = vmatprep.subr.mxu0 0.0
    %1142 = vmatpush1.xpose.msra.mxu0 0.0
    %1143 = vmatprep.subr.mxu0 0.0
    %1144 = vmatpush1.xpose.msra.mxu0 0.0
    %1145 = vmatprep.subr.mxu0 0.0
    %1146 = vmatpush1.xpose.msra.mxu0 0.0
    %1147 = vmatprep.subr.mxu0 0.0
    %1148 = vmatpush1.xpose.msra.mxu0 0.0
    %1149 = vmatprep.subr.mxu0 0.0
    %1150 = vmatpush1.xpose.msra.mxu0 0.0
    %1151 = vmatprep.subr.mxu0 0.0
    %1152 = vmatpush1.xpose.msra.mxu0 0.0
    %1153 = vmatprep.subr.mxu0 0.0
    %1154 = vmatpush1.xpose.msra.mxu0 0.0
    %1155 = vmatprep.subr.mxu0 0.0
    %1156 = vmatpush1.xpose.msra.mxu0 0.0
    %1157 = vmatprep.subr.mxu0 0.0
    %1158 = vmatpush1.xpose.msra.mxu0 0.0
    %1159 = vmatprep.subr.mxu0 0.0
    %1160 = vmatpush1.xpose.msra.mxu0 0.0
    %1161 = vmatprep.subr.mxu0 0.0
    %1162 = vmatpush1.xpose.msra.mxu0 0.0
    %1163 = vmatprep.subr.mxu0 0.0
    %1164 = vmatpush1.xpose.msra.mxu0 0.0
    %1165 = vmatprep.subr.mxu0 0.0
    %1166 = vmatpush1.xpose.msra.mxu0 0.0
    %1167 = vmatprep.subr.mxu0 0.0
    %1168 = vmatpush1.xpose.msra.mxu0 0.0
    %1169 = vmatprep.subr.mxu0 0.0
    %1170 = vmatpush1.xpose.msra.mxu0 0.0
    %1171 = vmatprep.subr.mxu0 0.0
    %1172 = vmatpush1.xpose.msra.mxu0 0.0
    %1173 = vmatprep.subr.mxu0 0.0
    %1174 = vmatpush1.xpose.msra.mxu0 0.0
    %1175 = vmatprep.subr.mxu0 0.0
    %1176 = vmatpush1.xpose.msra.mxu0 0.0
    %1177 = vmatprep.subr.mxu0 0.0
    %1178 = vmatpush1.xpose.msra.mxu0 0.0
    %1179 = vmatprep.subr.mxu0 0.0
    %1180 = vmatpush1.xpose.msra.mxu0 0.0
    %1181 = vmatprep.subr.mxu0 0.0
    %1182 = vmatpush1.xpose.msra.mxu0 0.0
    %1183 = vmatprep.subr.mxu0 0.0
    %1184 = vmatpush1.xpose.msra.mxu0 0.0
    %1185 = vmatprep.subr.mxu0 0.0
    %1186 = vmatpush1.xpose.msra.mxu0 0.0
    %1187 = vmatprep.subr.mxu0 0.0
    %1188 = vmatpush1.xpose.msra.mxu0 0.0
    %1189 = vmatprep.mubr.f32.mxu0 0.0
    %1190 = vmatmul.mubr.f32.gmra.mrb[0].mxu0 %v1121
    %v1191 = vpop.f32.mrb[0].mxu0
    %v1192 = vadd.f32 0.0, %v1191
    %v1193 = vpop.f32.mrb[0].mxu0
    %1194 = vdwg.mxu0
    %v1195 = vsel %vm87, %v1192, -1e+30
    %v1196 = vsel %vm166, %v1195, -inf
    %1197 = vmax.xlane.f32.xlu0 %v1196
    %v1198 = vpop.xlane.xlu0 %1197
    %v1199 = vsub.f32 %v1195, %v1198
    %v1200 = vmul.f32 %v1199, 1.442695
    %v1201 = vpow.pop %v1200
    %v1202 = vsel %vm166, %v1201, 0.0
    %1203 = vadd.xlane.f32.xlu0 %v1202
    %v1204 = vpop.xlane.xlu0 %1203
    %v1205 = vrcp.pop %v1204
    %v1206 = vmul.f32 %v1201, %v1205
    %1207 = vrot.lane.b32.xlu0 %v79, 96
    %v1208 = vpop.permute.xlu0 %1207
    %v1211 = vsel %vm166, %v1206, 0
    %1213 = vmatprep.subr.mxu0 0.0
    %1214 = vmatpush1.msra.mxu0 %v1208
    %1215 = vmatprep.subr.mxu0 0.0
    %1216 = vmatpush1.msra.mxu0 0.0
    %1217 = vmatprep.subr.mxu0 0.0
    %1218 = vmatpush1.msra.mxu0 0.0
    %1219 = vmatprep.subr.mxu0 0.0
    %1220 = vmatpush1.msra.mxu0 0.0
    %1221 = vmatprep.subr.mxu0 0.0
    %1222 = vmatpush1.msra.mxu0 0.0
    %1223 = vmatprep.subr.mxu0 0.0
    %1224 = vmatpush1.msra.mxu0 0.0
    %1225 = vmatprep.subr.mxu0 0.0
    %1226 = vmatpush1.msra.mxu0 0.0
    %1227 = vmatprep.subr.mxu0 0.0
    %1228 = vmatpush1.msra.mxu0 0.0
    %1229 = vmatprep.subr.mxu0 0.0
    %1230 = vmatpush1.msra.mxu0 0.0
    %1231 = vmatprep.subr.mxu0 0.0
    %1232 = vmatpush1.msra.mxu0 0.0
    %1233 = vmatprep.subr.mxu0 0.0
    %1234 = vmatpush1.msra.mxu0 0.0
    %1235 = vmatprep.subr.mxu0 0.0
    %1236 = vmatpush1.msra.mxu0 0.0
    %1237 = vmatprep.subr.mxu0 0.0
    %1238 = vmatpush1.msra.mxu0 0.0
    %1239 = vmatprep.subr.mxu0 0.0
    %1240 = vmatpush1.msra.mxu0 0.0
    %1241 = vmatprep.subr.mxu0 0.0
    %1242 = vmatpush1.msra.mxu0 0.0
    %1243 = vmatprep.subr.mxu0 0.0
    %1244 = vmatpush1.msra.mxu0 0.0
    %1245 = vmatprep.subr.mxu0 0.0
    %1246 = vmatpush1.msra.mxu0 0.0
    %1247 = vmatprep.subr.mxu0 0.0
    %1248 = vmatpush1.msra.mxu0 0.0
    %1249 = vmatprep.subr.mxu0 0.0
    %1250 = vmatpush1.msra.mxu0 0.0
    %1251 = vmatprep.subr.mxu0 0.0
    %1252 = vmatpush1.msra.mxu0 0.0
    %1253 = vmatprep.subr.mxu0 0.0
    %1254 = vmatpush1.msra.mxu0 0.0
    %1255 = vmatprep.subr.mxu0 0.0
    %1256 = vmatpush1.msra.mxu0 0.0
    %1257 = vmatprep.subr.mxu0 0.0
    %1258 = vmatpush1.msra.mxu0 0.0
    %1259 = vmatprep.subr.mxu0 0.0
    %1260 = vmatpush1.msra.mxu0 0.0
    %1261 = vmatprep.subr.mxu0 0.0
    %1262 = vmatpush1.msra.mxu0 0.0
    %1263 = vmatprep.subr.mxu0 0.0
    %1264 = vmatpush1.msra.mxu0 0.0
    %1265 = vmatprep.subr.mxu0 0.0
    %1266 = vmatpush1.msra.mxu0 0.0
    %1267 = vmatprep.subr.mxu0 0.0
    %1268 = vmatpush1.msra.mxu0 0.0
    %1269 = vmatprep.subr.mxu0 0.0
    %1270 = vmatpush1.msra.mxu0 0.0
    %1271 = vmatprep.subr.mxu0 0.0
    %1272 = vmatpush1.msra.mxu0 0.0
    %1273 = vmatprep.subr.mxu0 0.0
    %1274 = vmatpush1.msra.mxu0 0.0
    %1275 = vmatprep.subr.mxu0 0.0
    %1276 = vmatpush1.msra.mxu0 0.0
    %1277 = vmatprep.mubr.f32.mxu0 0.0
    %1278 = vmatmul.mubr.f32.gmra.mrb[0].mxu0 %v1211
    %v1279 = vpop.f32.mrb[0].mxu0
    %v1280 = vadd.f32 0.0, %v1279
    %v1281 = vpop.f32.mrb[0].mxu0
    %1282 = vdwg.mxu0
    %v1283 = vpack.c.bf16 %v1280, %v1280
    %v1285 = vrot.slane %v1283, 4
    %1286 = vrot.lane.b32.xlu0 %v1285, 32
    %v1287 = vpop.permute.xlu0 %1286
    %vm1289 = vcmask 392452
    %1290 = vst.msk [vmem:[#allocation2] sm:$0xf0] %vm1289, %v1287
    %1291 = vrot.lane.b32.xlu0 %v77, 80
    %v1292 = vpop.permute.xlu0 %1291
    %1293 = vrot.lane.b32.xlu0 %v77, 16
    %v1294 = vpop.permute.xlu0 %1293
    %v1295 = vsel %vm34, %v1292, 0
    %v1297 = vsel %vm34, %v1294, 0
    %1299 = vmatprep.subr.mxu0 0.0
    %1300 = vmatpush1.xpose.msra.mxu0 %v1297
    %1301 = vmatprep.subr.mxu0 0.0
    %1302 = vmatpush1.xpose.msra.mxu0 0.0
    %1303 = vmatprep.subr.mxu0 0.0
    %1304 = vmatpush1.xpose.msra.mxu0 0.0
    %1305 = vmatprep.subr.mxu0 0.0
    %1306 = vmatpush1.xpose.msra.mxu0 0.0
    %1307 = vmatprep.subr.mxu0 0.0
    %1308 = vmatpush1.xpose.msra.mxu0 0.0
    %1309 = vmatprep.subr.mxu0 0.0
    %1310 = vmatpush1.xpose.msra.mxu0 0.0
    %1311 = vmatprep.subr.mxu0 0.0
    %1312 = vmatpush1.xpose.msra.mxu0 0.0
    %1313 = vmatprep.subr.mxu0 0.0
    %1314 = vmatpush1.xpose.msra.mxu0 0.0
    %1315 = vmatprep.subr.mxu0 0.0
    %1316 = vmatpush1.xpose.msra.mxu0 0.0
    %1317 = vmatprep.subr.mxu0 0.0
    %1318 = vmatpush1.xpose.msra.mxu0 0.0
    %1319 = vmatprep.subr.mxu0 0.0
    %1320 = vmatpush1.xpose.msra.mxu0 0.0
    %1321 = vmatprep.subr.mxu0 0.0
    %1322 = vmatpush1.xpose.msra.mxu0 0.0
    %1323 = vmatprep.subr.mxu0 0.0
    %1324 = vmatpush1.xpose.msra.mxu0 0.0
    %1325 = vmatprep.subr.mxu0 0.0
    %1326 = vmatpush1.xpose.msra.mxu0 0.0
    %1327 = vmatprep.subr.mxu0 0.0
    %1328 = vmatpush1.xpose.msra.mxu0 0.0
    %1329 = vmatprep.subr.mxu0 0.0
    %1330 = vmatpush1.xpose.msra.mxu0 0.0
    %1331 = vmatprep.subr.mxu0 0.0
    %1332 = vmatpush1.xpose.msra.mxu0 0.0
    %1333 = vmatprep.subr.mxu0 0.0
    %1334 = vmatpush1.xpose.msra.mxu0 0.0
    %1335 = vmatprep.subr.mxu0 0.0
    %1336 = vmatpush1.xpose.msra.mxu0 0.0
    %1337 = vmatprep.subr.mxu0 0.0
    %1338 = vmatpush1.xpose.msra.mxu0 0.0
    %1339 = vmatprep.subr.mxu0 0.0
    %1340 = vmatpush1.xpose.msra.mxu0 0.0
    %1341 = vmatprep.subr.mxu0 0.0
    %1342 = vmatpush1.xpose.msra.mxu0 0.0
    %1343 = vmatprep.subr.mxu0 0.0
    %1344 = vmatpush1.xpose.msra.mxu0 0.0
    %1345 = vmatprep.subr.mxu0 0.0
    %1346 = vmatpush1.xpose.msra.mxu0 0.0
    %1347 = vmatprep.subr.mxu0 0.0
    %1348 = vmatpush1.xpose.msra.mxu0 0.0
    %1349 = vmatprep.subr.mxu0 0.0
    %1350 = vmatpush1.xpose.msra.mxu0 0.0
    %1351 = vmatprep.subr.mxu0 0.0
    %1352 = vmatpush1.xpose.msra.mxu0 0.0
    %1353 = vmatprep.subr.mxu0 0.0
    %1354 = vmatpush1.xpose.msra.mxu0 0.0
    %1355 = vmatprep.subr.mxu0 0.0
    %1356 = vmatpush1.xpose.msra.mxu0 0.0
    %1357 = vmatprep.subr.mxu0 0.0
    %1358 = vmatpush1.xpose.msra.mxu0 0.0
    %1359 = vmatprep.subr.mxu0 0.0
    %1360 = vmatpush1.xpose.msra.mxu0 0.0
    %1361 = vmatprep.subr.mxu0 0.0
    %1362 = vmatpush1.xpose.msra.mxu0 0.0
    %1363 = vmatprep.mubr.f32.mxu0 0.0
    %1364 = vmatmul.mubr.f32.gmra.mrb[0].mxu0 %v1295
    %v1365 = vpop.f32.mrb[0].mxu0
    %v1366 = vadd.f32 0.0, %v1365
    %v1367 = vpop.f32.mrb[0].mxu0
    %1368 = vdwg.mxu0
    %v1369 = vsel %vm87, %v1366, -1e+30
    %v1370 = vsel %vm166, %v1369, -inf
    %1371 = vmax.xlane.f32.xlu0 %v1370
    %v1372 = vpop.xlane.xlu0 %1371
    %v1373 = vsub.f32 %v1369, %v1372
    %v1374 = vmul.f32 %v1373, 1.442695
    %v1375 = vpow.pop %v1374
    %v1376 = vsel %vm166, %v1375, 0.0
    %1377 = vadd.xlane.f32.xlu0 %v1376
    %v1378 = vpop.xlane.xlu0 %1377
    %v1379 = vrcp.pop %v1378
    %v1380 = vmul.f32 %v1375, %v1379
    %1381 = vrot.lane.b32.xlu0 %v79, 80
    %v1382 = vpop.permute.xlu0 %1381
    %v1385 = vsel %vm166, %v1380, 0
    %1387 = vmatprep.subr.mxu0 0.0
    %1388 = vmatpush1.msra.mxu0 %v1382
    %1389 = vmatprep.subr.mxu0 0.0
    %1390 = vmatpush1.msra.mxu0 0.0
    %1391 = vmatprep.subr.mxu0 0.0
    %1392 = vmatpush1.msra.mxu0 0.0
    %1393 = vmatprep.subr.mxu0 0.0
    %1394 = vmatpush1.msra.mxu0 0.0
    %1395 = vmatprep.subr.mxu0 0.0
    %1396 = vmatpush1.msra.mxu0 0.0
    %1397 = vmatprep.subr.mxu0 0.0
    %1398 = vmatpush1.msra.mxu0 0.0
    %1399 = vmatprep.subr.mxu0 0.0
    %1400 = vmatpush1.msra.mxu0 0.0
    %1401 = vmatprep.subr.mxu0 0.0
    %1402 = vmatpush1.msra.mxu0 0.0
    %1403 = vmatprep.subr.mxu0 0.0
    %1404 = vmatpush1.msra.mxu0 0.0
    %1405 = vmatprep.subr.mxu0 0.0
    %1406 = vmatpush1.msra.mxu0 0.0
    %1407 = vmatprep.subr.mxu0 0.0
    %1408 = vmatpush1.msra.mxu0 0.0
    %1409 = vmatprep.subr.mxu0 0.0
    %1410 = vmatpush1.msra.mxu0 0.0
    %1411 = vmatprep.subr.mxu0 0.0
    %1412 = vmatpush1.msra.mxu0 0.0
    %1413 = vmatprep.subr.mxu0 0.0
    %1414 = vmatpush1.msra.mxu0 0.0
    %1415 = vmatprep.subr.mxu0 0.0
    %1416 = vmatpush1.msra.mxu0 0.0
    %1417 = vmatprep.subr.mxu0 0.0
    %1418 = vmatpush1.msra.mxu0 0.0
    %1419 = vmatprep.subr.mxu0 0.0
    %1420 = vmatpush1.msra.mxu0 0.0
    %1421 = vmatprep.subr.mxu0 0.0
    %1422 = vmatpush1.msra.mxu0 0.0
    %1423 = vmatprep.subr.mxu0 0.0
    %1424 = vmatpush1.msra.mxu0 0.0
    %1425 = vmatprep.subr.mxu0 0.0
    %1426 = vmatpush1.msra.mxu0 0.0
    %1427 = vmatprep.subr.mxu0 0.0
    %1428 = vmatpush1.msra.mxu0 0.0
    %1429 = vmatprep.subr.mxu0 0.0
    %1430 = vmatpush1.msra.mxu0 0.0
    %1431 = vmatprep.subr.mxu0 0.0
    %1432 = vmatpush1.msra.mxu0 0.0
    %1433 = vmatprep.subr.mxu0 0.0
    %1434 = vmatpush1.msra.mxu0 0.0
    %1435 = vmatprep.subr.mxu0 0.0
    %1436 = vmatpush1.msra.mxu0 0.0
    %1437 = vmatprep.subr.mxu0 0.0
    %1438 = vmatpush1.msra.mxu0 0.0
    %1439 = vmatprep.subr.mxu0 0.0
    %1440 = vmatpush1.msra.mxu0 0.0
    %1441 = vmatprep.subr.mxu0 0.0
    %1442 = vmatpush1.msra.mxu0 0.0
    %1443 = vmatprep.subr.mxu0 0.0
    %1444 = vmatpush1.msra.mxu0 0.0
    %1445 = vmatprep.subr.mxu0 0.0
    %1446 = vmatpush1.msra.mxu0 0.0
    %1447 = vmatprep.subr.mxu0 0.0
    %1448 = vmatpush1.msra.mxu0 0.0
    %1449 = vmatprep.subr.mxu0 0.0
    %1450 = vmatpush1.msra.mxu0 0.0
    %1451 = vmatprep.mubr.f32.mxu0 0.0
    %1452 = vmatmul.mubr.f32.gmra.mrb[0].mxu0 %v1385
    %v1453 = vpop.f32.mrb[0].mxu0
    %v1454 = vadd.f32 0.0, %v1453
    %v1455 = vpop.f32.mrb[0].mxu0
    %1456 = vdwg.mxu0
    %v1457 = vpack.c.bf16 %v1454, %v1454
    %v1459 = vrot.slane %v1457, 4
    %1460 = vrot.lane.b32.xlu0 %v1459, 48
    %v1461 = vpop.permute.xlu0 %1460
    %vm1463 = vcmask 523652
    %1464 = vst.msk [vmem:[#allocation2] sm:$0xf0] %vm1463, %v1461
    %v1465 = vld [vmem:[#allocation2] sm:$0xff]
    %v1466 = vld [vmem:[%s2] sm:$0xf]
    %v1467 = vld [vmem:[%s2 + $0x4] sm:$0xf]
    %v1468 = vld [vmem:[%s2 + $0x8] sm:$0xf]
    %v1469 = vld [vmem:[%s2 + $0xc] sm:$0xf]
    %v1470 = vld [vmem:[%s2 + $0x10] sm:$0xf]
    %v1471 = vld [vmem:[%s2 + $0x14] sm:$0xf]
    %v1472 = vld [vmem:[%s2 + $0x18] sm:$0xf]
    %v1473 = vld [vmem:[%s2 + $0x1c] sm:$0xf]
    %v1474 = vld [vmem:[%s2 + $0x20] sm:$0xf]
    %v1475 = vld [vmem:[%s2 + $0x24] sm:$0xf]
    %v1476 = vld [vmem:[%s2 + $0x28] sm:$0xf]
    %v1477 = vld [vmem:[%s2 + $0x2c] sm:$0xf]
    %v1478 = vld [vmem:[%s2 + $0x30] sm:$0xf]
    %v1479 = vld [vmem:[%s2 + $0x34] sm:$0xf]
    %v1480 = vld [vmem:[%s2 + $0x38] sm:$0xf]
    %v1481 = vld [vmem:[%s2 + $0x3c] sm:$0xf]
    %v1482 = vld [vmem:[%s3] sm:$0x1]
    %v1484 = vlaneseq
    %v1485 = vshrl.u32 %v1484, 7
    %v1486 = vsub.s32 0, %v1485
    %v1487 = vrot.slane %v1482, %v1486
    %v1505 = vunpack.c.l.b16 %v1466
    %v1506 = vunpack.c.l.b16 %v1467
    %v1507 = vunpack.c.l.b16 %v1468
    %v1508 = vunpack.c.l.b16 %v1469
    %v1509 = vunpack.c.l.b16 %v1470
    %v1510 = vunpack.c.l.b16 %v1471
    %v1511 = vunpack.c.l.b16 %v1472
    %v1512 = vunpack.c.l.b16 %v1473
    %v1513 = vunpack.c.l.b16 %v1474
    %v1514 = vunpack.c.l.b16 %v1475
    %v1515 = vunpack.c.l.b16 %v1476
    %v1516 = vunpack.c.l.b16 %v1477
    %v1517 = vunpack.c.l.b16 %v1478
    %v1518 = vunpack.c.l.b16 %v1479
    %v1519 = vunpack.c.l.b16 %v1480
    %v1520 = vunpack.c.l.b16 %v1481
    %v1521 = vpack.c.b16 %v1506, %v1505
    %v1522 = vpack.c.b16 %v1508, %v1507
    %v1523 = vpack.c.b16 %v1510, %v1509
    %v1524 = vpack.c.b16 %v1512, %v1511
    %v1525 = vpack.c.b16 %v1514, %v1513
    %v1526 = vpack.c.b16 %v1516, %v1515
    %v1527 = vpack.c.b16 %v1518, %v1517
    %v1528 = vpack.c.b16 %v1520, %v1519
    %1537 = vmatprep.subr.bf16.mxu0 0
    %1538 = vmatpush1.bf16.msra.mxu0 %v1521
    %1539 = vmatprep.subr.bf16.mxu0 0
    %1540 = vmatpush1.bf16.msra.mxu0 %v1522
    %1541 = vmatprep.subr.bf16.mxu0 0
    %1542 = vmatpush1.bf16.msra.mxu0 %v1523
    %1543 = vmatprep.subr.bf16.mxu0 0
    %1544 = vmatpush1.bf16.msra.mxu0 %v1524
    %1545 = vmatprep.subr.bf16.mxu0 0
    %1546 = vmatpush1.bf16.msra.mxu0 %v1525
    %1547 = vmatprep.subr.bf16.mxu0 0
    %1548 = vmatpush1.bf16.msra.mxu0 %v1526
    %1549 = vmatprep.subr.bf16.mxu0 0
    %1550 = vmatpush1.bf16.msra.mxu0 %v1527
    %1551 = vmatprep.subr.bf16.mxu0 0
    %1552 = vmatpush1.bf16.msra.mxu0 %v1528
    %1553 = vmatprep.subr.bf16.mxu0 0
    %1554 = vmatpush1.bf16.msra.mxu0 0
    %1555 = vmatprep.subr.bf16.mxu0 0
    %1556 = vmatpush1.bf16.msra.mxu0 0
    %1557 = vmatprep.subr.bf16.mxu0 0
    %1558 = vmatpush1.bf16.msra.mxu0 0
    %1559 = vmatprep.subr.bf16.mxu0 0
    %1560 = vmatpush1.bf16.msra.mxu0 0
    %1561 = vmatprep.subr.bf16.mxu0 0
    %1562 = vmatpush1.bf16.msra.mxu0 0
    %1563 = vmatprep.subr.bf16.mxu0 0
    %1564 = vmatpush1.bf16.msra.mxu0 0
    %1565 = vmatprep.subr.bf16.mxu0 0
    %1566 = vmatpush1.bf16.msra.mxu0 0
    %1567 = vmatprep.subr.bf16.mxu0 0
    %1568 = vmatpush1.bf16.msra.mxu0 0
    %1569 = vmatprep.mubr.bf16.mxu0 0
    %1570 = vmatmul.mubr.bf16.gmra.mrb[0].mxu0 %v1465
    %v1571 = vpop.f32.mrb[0].mxu0
    %v1572 = vadd.f32 %v1487, %v1571
    %v1573 = vpop.f32.mrb[0].mxu0
    %v1574 = vpop.f32.mrb[0].mxu0
    %v1575 = vadd.f32 %v1487, %v1574
    %v1576 = vpop.f32.mrb[0].mxu0
    %1577 = vdwg.mxu0
    %v1578 = vpack.c.bf16 %v1572, %v1572
    %v1579 = vpack.c.bf16 %v1575, %v1575
    %1580 = vst.msk [vmem:[#allocation3] sm:$0xf] %vm252, %v1578
    %1581 = vst.msk [vmem:[#allocation3 + $0x4] sm:$0xf] %vm252, %v1579
    // Predicated region
    $region18: #{tpu_custom_call.1} parent=1 // pred_check
      _
    $region19: #{tpu_custom_call.1} parent=1 // pred_check_branch
      %1583 = sbr.rel (0) target = $region21
    $region20: #{tpu_custom_call.1} parent=1 // pred_region
      %s1585 = ssub.s32 128, 128
      %1586 = vsyncadd [#allocation4], %s1585
      %s1587 = sshll.u32 [#allocation3], 4
      %s1588 = int_to_ptr.vmem [resolvable:$true] %s1587
      %1593 = dma.vmem_to_hbm [thread:$0]  %s1588, 128, %s4, [#allocation4], 64, 64, 4
    $region21: #{tpu_custom_call.1} parent=1 // pred_fallthru
      _
    // Predicated region
    $region22: #{tpu_custom_call.1} parent=1 // pred_check
      _
    $region23: #{tpu_custom_call.1} parent=1 // pred_check_branch
      %1595 = sbr.rel (0) target = $region25
    $region24: #{tpu_custom_call.1} parent=1 // pred_region
      %1596 = dma.done [#allocation4], 128
    $region25: #{tpu_custom_call.1} parent=1 // pred_fallthru
      _
    %1597 = vsyncpa [#allocation4], 1

</llo_original>
